<compile_context>
chip_gen: v7x
topology: tpu7x:2x2x1
jax: 0.10.0
libtpu: 0.0.40
codegen_flags: <defaults>
</compile_context>

<pallas_src>
import functools

import jax
import jax.numpy as jnp
from jax.experimental import pallas as pl
from jax.experimental.pallas import tpu as pltpu


def _round_up(x, m):
    return (x + m - 1) // m * m


# ---------------------------------------------------------------------------
# Kernel body: whole 4-layer MLP for one batch tile.
# ---------------------------------------------------------------------------
def mlp_kernel(x_ref, w0_ref, b0_ref, w1_ref, b1_ref, w2_ref, b2_ref,
               w3_ref, b3_ref, o_ref):
    """3x (Linear+ReLU) + final Linear.

    Matmuls run in the weights' dtype (bf16 on the fast path) with f32 MXU
    accumulation; biases are added in f32; output cast to o_ref.dtype.
    """
    cdt = w0_ref.dtype
    h = x_ref[...]
    h = jnp.maximum(
        jnp.dot(h, w0_ref[...], preferred_element_type=jnp.float32)
        + b0_ref[...], 0.0).astype(cdt)
    h = jnp.maximum(
        jnp.dot(h, w1_ref[...], preferred_element_type=jnp.float32)
        + b1_ref[...], 0.0).astype(cdt)
    h = jnp.maximum(
        jnp.dot(h, w2_ref[...], preferred_element_type=jnp.float32)
        + b2_ref[...], 0.0).astype(cdt)
    out = jnp.dot(h, w3_ref[...], preferred_element_type=jnp.float32) + b3_ref[...]
    o_ref[...] = out.astype(o_ref.dtype)


# ---------------------------------------------------------------------------
# Per-generation knobs.
# ---------------------------------------------------------------------------
@functools.lru_cache(maxsize=1)
def _chip_profile():
    """Returns (usable VMEM budget bytes, MXU alignment, multi-TensorCore)."""
    kind = ""
    try:
        kind = jax.devices()[0].device_kind.lower()
    except Exception:
        pass
    vmem_cap = None
    try:
        vmem_cap = int(pltpu.get_tpu_info().vmem_capacity_bytes)
    except Exception:
        vmem_cap = None

    if "v7" in kind:
        cap = vmem_cap if vmem_cap else (64 << 20)
        # 64 MiB/TC is the whole physical VMEM: leave headroom for Mosaic scratch.
        return min(56 << 20, max(cap - (8 << 20), 32 << 20)), 256, True
    if "v6" in kind:
        cap = vmem_cap if vmem_cap else (128 << 20)
        return min(104 << 20, max(cap - (24 << 20), 32 << 20)), 256, False
    if "v5" in kind or "v4" in kind:
        cap = vmem_cap if vmem_cap else (128 << 20)
        return min(104 << 20, max(cap - (24 << 20), 32 << 20)), 128, False
    # Unknown chip: conservative v7x-like assumptions.
    cap = vmem_cap if vmem_cap else (64 << 20)
    return min(56 << 20, max(cap - (8 << 20), 32 << 20)), 256, True


@functools.lru_cache(maxsize=1)
def _buffered_one_supported():
    """One-time probe: does this jax/Mosaic accept pl.Buffered(1) BlockSpecs?

    Single-buffering the grid-invariant weight blocks halves their VMEM
    footprint. Probing once avoids re-tracing the real kernel on fallback and
    keeps genuine lowering errors from being silently swallowed.
    """
    if not hasattr(pl, "Buffered"):
        return False

    def k(x_ref, c_ref, o_ref):
        o_ref[...] = x_ref[...] + c_ref[...]

    try:
        f = pl.pallas_call(
            k,
            out_shape=jax.ShapeDtypeStruct((16, 128), jnp.float32),
            grid_spec=pltpu.PrefetchScalarGridSpec(
                num_scalar_prefetch=0,
                grid=(2,),
                in_specs=[
                    pl.BlockSpec((8, 128), lambda i: (i, 0)),
                    pl.BlockSpec((8, 128), lambda i: (0, 0),
                                 pipeline_mode=pl.Buffered(1)),
                ],
                out_specs=pl.BlockSpec((8, 128), lambda i: (i, 0)),
            ),
        )
        jax.block_until_ready(f(jnp.zeros((16, 128), jnp.float32),
                                jnp.ones((8, 128), jnp.float32)))
        return True
    except Exception:
        return False


def _build_mlp_call(b_pad, tb, d_in, d_out_pad, op_shapes, out_dtype,
                    vmem_limit_bytes, single_buffer_weights):
    if single_buffer_weights:
        def const_spec(shape):
            # Weights/biases never change block index: single-buffer them.
            return pl.BlockSpec(shape, lambda i: (0, 0),
                                pipeline_mode=pl.Buffered(1))
    else:
        def const_spec(shape):
            return pl.BlockSpec(shape, lambda i: (0, 0))

    in_specs = [pl.BlockSpec((tb, d_in), lambda i: (i, 0))]
    in_specs += [const_spec(s) for s in op_shapes]

    return pl.pallas_call(
        mlp_kernel,
        out_shape=jax.ShapeDtypeStruct((b_pad, d_out_pad), out_dtype),
        grid_spec=pltpu.PrefetchScalarGridSpec(
            num_scalar_prefetch=0,
            grid=(b_pad // tb,),
            in_specs=in_specs,
            out_specs=pl.BlockSpec((tb, d_out_pad), lambda i: (i, 0)),
        ),
        compiler_params=pltpu.CompilerParams(
            dimension_semantics=("parallel",),
            vmem_limit_bytes=vmem_limit_bytes),
    )


def mlp_forward(x, params, *, tb=None, compute_dtype=jnp.bfloat16):
    """Fused PEARL MLP forward.

    params = (w0, b0, w1, b1, w2, b2, w3, b3); weights stored (in, out) ==
    W_pytorch.T, biases (out,) or (1, out).

    compute_dtype=bfloat16 is the production path (bf16 operands, f32 MXU
    accumulation). float32 is a validation path: f32 operands run multi-pass
    on the MXU (>=3x slower) and double the resident-weight VMEM footprint.
    """
    w0, b0, w1, b1, w2, b2, w3, b3 = params
    b0, b1, b2, b3 = (b.reshape(1, -1) for b in (b0, b1, b2, b3))
    out_dtype = x.dtype
    B, d_in = x.shape
    d_h = w0.shape[-1]
    d_out = w3.shape[-1]

    vmem_budget, mxu_align, multi_core = _chip_profile()

    # --- pad hidden dims to the MXU-friendly multiple (128 on v5e, 256 on
    # v6e/v7x). Zero rows/columns propagate exact zeros through ReLU, so the
    # visible result is unchanged; the weights are VMEM-resident, so padding
    # costs only a one-time DMA of extra zero bytes.
    d_h_pad = _round_up(d_h, mxu_align)
    if d_h_pad != d_h:
        ph = d_h_pad - d_h
        w0 = jnp.pad(w0, ((0, 0), (0, ph)))
        b0 = jnp.pad(b0, ((0, 0), (0, ph)))
        w1 = jnp.pad(w1, ((0, ph), (0, ph)))
        b1 = jnp.pad(b1, ((0, 0), (0, ph)))
        w2 = jnp.pad(w2, ((0, ph), (0, ph)))
        b2 = jnp.pad(b2, ((0, 0), (0, ph)))
        w3 = jnp.pad(w3, ((0, ph), (0, 0)))

    # --- lane-dense output: pad the final projection to a multiple of 128 so
    # output stores are full-width vst (not masked partial stores).
    d_out_pad = _round_up(d_out, 128)
    if d_out_pad != d_out:
        w3 = jnp.pad(w3, ((0, 0), (0, d_out_pad - d_out)))
        b3 = jnp.pad(b3, ((0, 0), (0, d_out_pad - d_out)))

    cbytes = jnp.dtype(compute_dtype).itemsize
    out_bytes = jnp.dtype(out_dtype).itemsize
    ws = [w.astype(compute_dtype) for w in (w0, w1, w2, w3)]
    bs = [b.astype(jnp.float32) for b in (b0, b1, b2, b3)]
    ops = [ws[0], bs[0], ws[1], bs[1], ws[2], bs[2], ws[3], bs[3]]
    op_shapes = [p.shape for p in ops]

    single_buffer = _buffered_one_supported()
    weight_bytes = sum(int(w.size) * cbytes for w in ws)
    bias_bytes = sum(int(b.size) * 4 for b in bs)
    # TODO(synk): hidden-dim-tiled variant (2nd "arbitrary" grid axis + f32
    # VMEM accumulator) for weight sets too large to stay VMEM-resident
    # (v7x with hidden_dim >~ 2048 bf16).

    def vmem_need(t):
        w_mult = 1 if single_buffer else 2          # weights single-buffered
        tiles = 2 * (t * d_in * cbytes) + 2 * (t * d_out_pad * out_bytes)
        interm = 3 * t * d_h_pad * 4                # f32 pre-act + cast copies
        return w_mult * (weight_bytes + bias_bytes) + tiles + interm

    # --- batch tile: sublane-aligned for the compute dtype (16 rows for bf16,
    # 8 for f32), large to amortize the ~0.35us/step pipeline overhead,
    # bounded by the VMEM budget; on v7x keep >=2 grid steps so the "parallel"
    # batch axis feeds both TensorCores.
    sub = 8 * max(1, 4 // cbytes)
    if tb is None:
        tb = min(1024, _round_up(B, sub))
        if multi_core and B >= 2 * sub:
            tb = min(tb, _round_up(-(-B // 2), sub))
        while tb > sub and vmem_need(tb) > vmem_budget:
            tb = max(sub, _round_up(tb // 2, sub))
    tb = max(sub, _round_up(int(tb), sub))

    b_pad = _round_up(B, tb)
    if b_pad != B:
        x = jnp.pad(x, ((0, b_pad - B), (0, 0)))
    xc = x.astype(compute_dtype)

    vmem_limit = int(min(vmem_budget, max(32 << 20, int(1.25 * vmem_need(tb)))))

    call = _build_mlp_call(b_pad, tb, d_in, d_out_pad, op_shapes, out_dtype,
                           vmem_limit, single_buffer)
    out = call(xc, *ops)
    return out[:B, :d_out]                          # already in caller's dtype


# ---------------------------------------------------------------------------
# Init (mirrors nn.Linear defaults + uniform(-init_w, init_w) for last layer)
# and a pure-JAX reference.
# ---------------------------------------------------------------------------
def init_mlp_params(key, input_dim, output_dim, hidden_dim, init_w=0.003):
    dims = [input_dim, hidden_dim, hidden_dim, hidden_dim]
    params = []
    for i in range(3):
        fan_in, fan_out = dims[i], dims[i + 1]
        key, kw, kb = jax.random.split(key, 3)
        bound = 1.0 / jnp.sqrt(fan_in)
        w = jax.random.uniform(kw, (fan_in, fan_out), jnp.float32, -bound, bound)
        b = jax.random.uniform(kb, (1, fan_out), jnp.float32, -bound, bound)
        params += [w, b]
    key, kw, kb = jax.random.split(key, 3)
    w = jax.random.uniform(kw, (hidden_dim, output_dim), jnp.float32, -init_w, init_w)
    b = jax.random.uniform(kb, (1, output_dim), jnp.float32, -init_w, init_w)
    params += [w, b]
    return tuple(params)


def mlp_reference(x, params):
    w0, b0, w1, b1, w2, b2, w3, b3 = params
    h = jnp.maximum(x @ w0 + b0, 0.0)
    h = jnp.maximum(h @ w1 + b1, 0.0)
    h = jnp.maximum(h @ w2 + b2, 0.0)
    return h @ w3 + b3


if __name__ == "__main__":
    key = jax.random.PRNGKey(0)
    # Odd batch size exercises the padding path; hidden=32 exercises the
    # hidden-dim padding (128/256) path; output=4 the lane-dense output pad.
    batch, input_dim, hidden_dim, output_dim = 19, 16, 32, 4

    kx, kp, kx2 = jax.random.split(key, 3)
    x = jax.random.normal(kx, (batch, input_dim), jnp.float32)
    params = init_mlp_params(kp, input_dim, output_dim, hidden_dim)

    ref = mlp_reference(x, params)

    # f32 validation path: matches nn.Linear semantics tightly.
    out_f32 = jax.block_until_ready(mlp_forward(x, params, compute_dtype=jnp.float32))
    assert out_f32.shape == (batch, output_dim)
    assert jnp.allclose(out_f32, ref, atol=1e-5, rtol=1e-5), "f32 mismatch vs reference"

    # bf16 production path (MXU-rate matmuls, f32 accumulation).
    out_bf16 = jax.block_until_ready(mlp_forward(x, params, compute_dtype=jnp.bfloat16))
    assert out_bf16.shape == (batch, output_dim)
    assert jnp.allclose(out_bf16, ref, atol=2e-2, rtol=2e-2), "bf16 mismatch vs reference"

    # Larger batch with an explicit small tile: exercises the multi-step
    # batch-tiled grid path.
    x2 = jax.random.normal(kx2, (200, input_dim), jnp.float32)
    ref2 = mlp_reference(x2, params)
    out2 = jax.block_until_ready(
        mlp_forward(x2, params, tb=64, compute_dtype=jnp.bfloat16))
    assert out2.shape == (200, output_dim)
    assert jnp.allclose(out2, ref2, atol=2e-2, rtol=2e-2), "tiled-grid mismatch"

    print("KERNEL_OK")
</pallas_src>

<mosaic_0001>
module attributes {stable_mosaic.version = 11 : i64} {
  func.func @k(%arg0: i32, %arg1: memref<8x128xf32, #tpu.memory_space<vmem>>, %arg2: memref<8x128xf32, #tpu.memory_space<vmem>>, %arg3: memref<8x128xf32, #tpu.memory_space<vmem>>) attributes {dimension_semantics = [#tpu.dimension_semantics<arbitrary>], iteration_bounds = array<i64: 2>, scalar_prefetch = 0 : i64, scratch_operands = 0 : i64, tpu.core_type = #tpu.core_type<tc>, window_params = [{transform_indices = @transform_0, window_bounds = array<i64: 8, 128>}, {pipeline_mode = #tpu.pipeline_mode<synchronous>, transform_indices = @transform_1, window_bounds = array<i64: 8, 128>}, {transform_indices = @transform_2, window_bounds = array<i64: 8, 128>}]} {
    %c0 = arith.constant 0 : index
    %c0_0 = arith.constant 0 : index
    %0 = vector.load %arg1[%c0, %c0_0] : memref<8x128xf32, #tpu.memory_space<vmem>>, vector<8x128xf32>
    %c0_1 = arith.constant 0 : index
    %c0_2 = arith.constant 0 : index
    %1 = vector.load %arg2[%c0_1, %c0_2] : memref<8x128xf32, #tpu.memory_space<vmem>>, vector<8x128xf32>
    %2 = arith.addf %0, %1 : vector<8x128xf32>
    %c0_3 = arith.constant 0 : index
    %c0_4 = arith.constant 0 : index
    %3 = vector.load %arg3[%c0_3, %c0_4] : memref<8x128xf32, #tpu.memory_space<vmem>>, vector<8x128xf32>
    tpu.vector_store %arg3[%c0_3, %c0_4], %2 {strides = array<i32>} : memref<8x128xf32, #tpu.memory_space<vmem>>, vector<8x128xf32>,
    return
  }
  func.func @transform_0(%arg0: i32) -> (i32, i32) {
    %c0_i32 = arith.constant 0 : i32
    %c0_i32_0 = arith.constant 0 : i32
    return %arg0, %c0_i32 : i32, i32
  }
  func.func @transform_1(%arg0: i32) -> (i32, i32) {
    %c0_i32 = arith.constant 0 : i32
    %c0_i32_0 = arith.constant 0 : i32
    %c0_i32_1 = arith.constant 0 : i32
    return %c0_i32, %c0_i32_0 : i32, i32
  }
  func.func @transform_2(%arg0: i32) -> (i32, i32) {
    %c0_i32 = arith.constant 0 : i32
    %c0_i32_0 = arith.constant 0 : i32
    return %arg0, %c0_i32 : i32, i32
  }
}

module attributes {stable_mosaic.version = 11 : i64} {
  func.func @mlp_kernel(%arg0: i32, %arg1: memref<16x16xf32, #tpu.memory_space<vmem>>, %arg2: memref<16x256xf32, #tpu.memory_space<vmem>>, %arg3: memref<1x256xf32, #tpu.memory_space<vmem>>, %arg4: memref<256x256xf32, #tpu.memory_space<vmem>>, %arg5: memref<1x256xf32, #tpu.memory_space<vmem>>, %arg6: memref<256x256xf32, #tpu.memory_space<vmem>>, %arg7: memref<1x256xf32, #tpu.memory_space<vmem>>, %arg8: memref<256x128xf32, #tpu.memory_space<vmem>>, %arg9: memref<1x128xf32, #tpu.memory_space<vmem>>, %arg10: memref<16x128xf32, #tpu.memory_space<vmem>>) attributes {dimension_semantics = [#tpu.dimension_semantics<parallel>], iteration_bounds = array<i64: 2>, scalar_prefetch = 0 : i64, scratch_operands = 0 : i64, tpu.core_type = #tpu.core_type<tc>, window_params = [{transform_indices = @transform_0, window_bounds = array<i64: 16, 16>}, {pipeline_mode = #tpu.pipeline_mode<synchronous>, transform_indices = @transform_1, window_bounds = array<i64: 16, 256>}, {pipeline_mode = #tpu.pipeline_mode<synchronous>, transform_indices = @transform_2, window_bounds = array<i64: 1, 256>}, {pipeline_mode = #tpu.pipeline_mode<synchronous>, transform_indices = @transform_3, window_bounds = array<i64: 256, 256>}, {pipeline_mode = #tpu.pipeline_mode<synchronous>, transform_indices = @transform_4, window_bounds = array<i64: 1, 256>}, {pipeline_mode = #tpu.pipeline_mode<synchronous>, transform_indices = @transform_5, window_bounds = array<i64: 256, 256>}, {pipeline_mode = #tpu.pipeline_mode<synchronous>, transform_indices = @transform_6, window_bounds = array<i64: 1, 256>}, {pipeline_mode = #tpu.pipeline_mode<synchronous>, transform_indices = @transform_7, window_bounds = array<i64: 256, 128>}, {pipeline_mode = #tpu.pipeline_mode<synchronous>, transform_indices = @transform_8, window_bounds = array<i64: 1, 128>}, {transform_indices = @transform_9, window_bounds = array<i64: 16, 128>}]} {
    %c0 = arith.constant 0 : index
    %c0_0 = arith.constant 0 : index
    %0 = vector.load %arg1[%c0, %c0_0] : memref<16x16xf32, #tpu.memory_space<vmem>>, vector<16x16xf32>
    %c0_1 = arith.constant 0 : index
    %c0_2 = arith.constant 0 : index
    %1 = vector.load %arg2[%c0_1, %c0_2] : memref<16x256xf32, #tpu.memory_space<vmem>>, vector<16x256xf32>
    %cst = arith.constant dense<0.000000e+00> : vector<16x256xf32>
    %2 = tpu.matmul %0, %1, %cst {dimension_numbers = #tpu.dot_dimension_numbers<[1], [0], [0], [1], [0, 0, 1, 1], [], []>} : vector<16x16xf32>, vector<16x256xf32>, vector<16x256xf32> -> vector<16x256xf32>
    %c0_3 = arith.constant 0 : index
    %c0_4 = arith.constant 0 : index
    %3 = vector.load %arg3[%c0_3, %c0_4] : memref<1x256xf32, #tpu.memory_space<vmem>>, vector<1x256xf32>
    %4 = vector.broadcast %3 : vector<1x256xf32> to vector<16x256xf32>
    %5 = arith.addf %2, %4 : vector<16x256xf32>
    %cst_5 = arith.constant 0.000000e+00 : f32
    %6 = vector.broadcast %cst_5 : f32 to vector<16x256xf32>
    %7 = arith.maximumf %5, %6 : vector<16x256xf32>
    %c0_6 = arith.constant 0 : index
    %c0_7 = arith.constant 0 : index
    %8 = vector.load %arg4[%c0_6, %c0_7] : memref<256x256xf32, #tpu.memory_space<vmem>>, vector<256x256xf32>
    %cst_8 = arith.constant dense<0.000000e+00> : vector<16x256xf32>
    %9 = tpu.matmul %7, %8, %cst_8 {dimension_numbers = #tpu.dot_dimension_numbers<[1], [0], [0], [1], [0, 0, 1, 1], [], []>} : vector<16x256xf32>, vector<256x256xf32>, vector<16x256xf32> -> vector<16x256xf32>
    %c0_9 = arith.constant 0 : index
    %c0_10 = arith.constant 0 : index
    %10 = vector.load %arg5[%c0_9, %c0_10] : memref<1x256xf32, #tpu.memory_space<vmem>>, vector<1x256xf32>
    %11 = vector.broadcast %10 : vector<1x256xf32> to vector<16x256xf32>
    %12 = arith.addf %9, %11 : vector<16x256xf32>
    %cst_11 = arith.constant 0.000000e+00 : f32
    %13 = vector.broadcast %cst_11 : f32 to vector<16x256xf32>
    %14 = arith.maximumf %12, %13 : vector<16x256xf32>
    %c0_12 = arith.constant 0 : index
    %c0_13 = arith.constant 0 : index
    %15 = vector.load %arg6[%c0_12, %c0_13] : memref<256x256xf32, #tpu.memory_space<vmem>>, vector<256x256xf32>
    %cst_14 = arith.constant dense<0.000000e+00> : vector<16x256xf32>
    %16 = tpu.matmul %14, %15, %cst_14 {dimension_numbers = #tpu.dot_dimension_numbers<[1], [0], [0], [1], [0, 0, 1, 1], [], []>} : vector<16x256xf32>, vector<256x256xf32>, vector<16x256xf32> -> vector<16x256xf32>
    %c0_15 = arith.constant 0 : index
    %c0_16 = arith.constant 0 : index
    %17 = vector.load %arg7[%c0_15, %c0_16] : memref<1x256xf32, #tpu.memory_space<vmem>>, vector<1x256xf32>
    %18 = vector.broadcast %17 : vector<1x256xf32> to vector<16x256xf32>
    %19 = arith.addf %16, %18 : vector<16x256xf32>
    %cst_17 = arith.constant 0.000000e+00 : f32
    %20 = vector.broadcast %cst_17 : f32 to vector<16x256xf32>
    %21 = arith.maximumf %19, %20 : vector<16x256xf32>
    %c0_18 = arith.constant 0 : index
    %c0_19 = arith.constant 0 : index
    %22 = vector.load %arg8[%c0_18, %c0_19] : memref<256x128xf32, #tpu.memory_space<vmem>>, vector<256x128xf32>
    %cst_20 = arith.constant dense<0.000000e+00> : vector<16x128xf32>
    %23 = tpu.matmul %21, %22, %cst_20 {dimension_numbers = #tpu.dot_dimension_numbers<[1], [0], [0], [1], [0, 0, 1, 1], [], []>} : vector<16x256xf32>, vector<256x128xf32>, vector<16x128xf32> -> vector<16x128xf32>
    %c0_21 = arith.constant 0 : index
    %c0_22 = arith.constant 0 : index
    %24 = vector.load %arg9[%c0_21, %c0_22] : memref<1x128xf32, #tpu.memory_space<vmem>>, vector<1x128xf32>
    %25 = vector.broadcast %24 : vector<1x128xf32> to vector<16x128xf32>
    %26 = arith.addf %23, %25 : vector<16x128xf32>
    %c0_23 = arith.constant 0 : index
    %c0_24 = arith.constant 0 : index
    %27 = vector.load %arg10[%c0_23, %c0_24] : memref<16x128xf32, #tpu.memory_space<vmem>>, vector<16x128xf32>
    tpu.vector_store %arg10[%c0_23, %c0_24], %26 {strides = array<i32>} : memref<16x128xf32, #tpu.memory_space<vmem>>, vector<16x128xf32>,
    return
  }
  func.func @transform_0(%arg0: i32) -> (i32, i32) {
    %c0_i32 = arith.constant 0 : i32
    %c0_i32_0 = arith.constant 0 : i32
    return %arg0, %c0_i32 : i32, i32
  }
  func.func @transform_1(%arg0: i32) -> (i32, i32) {
    %c0_i32 = arith.constant 0 : i32
    %c0_i32_0 = arith.constant 0 : i32
    %c0_i32_1 = arith.constant 0 : i32
    return %c0_i32, %c0_i32_0 : i32, i32
  }
  func.func @transform_2(%arg0: i32) -> (i32, i32) {
    %c0_i32 = arith.constant 0 : i32
    %c0_i32_0 = arith.constant 0 : i32
    %c0_i32_1 = arith.constant 0 : i32
    return %c0_i32, %c0_i32_0 : i32, i32
  }
  func.func @transform_3(%arg0: i32) -> (i32, i32) {
    %c0_i32 = arith.constant 0 : i32
    %c0_i32_0 = arith.constant 0 : i32
    %c0_i32_1 = arith.constant 0 : i32
    return %c0_i32, %c0_i32_0 : i32, i32
  }
  func.func @transform_4(%arg0: i32) -> (i32, i32) {
    %c0_i32 = arith.constant 0 : i32
    %c0_i32_0 = arith.constant 0 : i32
    %c0_i32_1 = arith.constant 0 : i32
    return %c0_i32, %c0_i32_0 : i32, i32
  }
  func.func @transform_5(%arg0: i32) -> (i32, i32) {
    %c0_i32 = arith.constant 0 : i32
    %c0_i32_0 = arith.constant 0 : i32
    %c0_i32_1 = arith.constant 0 : i32
    return %c0_i32, %c0_i32_0 : i32, i32
  }
  func.func @transform_6(%arg0: i32) -> (i32, i32) {
    %c0_i32 = arith.constant 0 : i32
    %c0_i32_0 = arith.constant 0 : i32
    %c0_i32_1 = arith.constant 0 : i32
    return %c0_i32, %c0_i32_0 : i32, i32
  }
  func.func @transform_7(%arg0: i32) -> (i32, i32) {
    %c0_i32 = arith.constant 0 : i32
    %c0_i32_0 = arith.constant 0 : i32
    %c0_i32_1 = arith.constant 0 : i32
    return %c0_i32, %c0_i32_0 : i32, i32
  }
  func.func @transform_8(%arg0: i32) -> (i32, i32) {
    %c0_i32 = arith.constant 0 : i32
    %c0_i32_0 = arith.constant 0 : i32
    %c0_i32_1 = arith.constant 0 : i32
    return %c0_i32, %c0_i32_0 : i32, i32
  }
  func.func @transform_9(%arg0: i32) -> (i32, i32) {
    %c0_i32 = arith.constant 0 : i32
    %c0_i32_0 = arith.constant 0 : i32
    return %arg0, %c0_i32 : i32, i32
  }
}

</mosaic_0001>

<llo_original>
// kernel: tpu_custom_call.1
$region0: #{tpu_custom_call.1}
  #allocation0 [shape = 'u32[]', space=smem, size = 0x4, offset = 0x4, fixed_abs, tag = 'smem constant byte address 0x4 - core index']
  #allocation1 [shape = 'u32[144,128]{1,0:T(1,128)}', space=vmem, size = 0x12000, scoped, tag = 'internal scratch']
  %s0 = inlined_call_operand.hbm [shape: f32[16,128], index: 0, kind: input, shape index: {}]
  %s1 = inlined_call_operand.hbm [shape: f32[8,128], index: 1, kind: input, shape index: {}]
  %s2 = inlined_call_operand.hbm [shape: f32[16,128], index: 2, kind: output, shape index: {}]
  %s3 = sld [smem:[#allocation0]]
  $region49: #{tpu_custom_call.1} parent=0
    _
  %s5 = ssub.s32 1, %s3
  %s6 = scalar_select 0, %s5, %s3
  $region1: #{tpu_custom_call.1} parent=0
    #allocation2 [shape = 'u8[8192]{0}', space=vmem, size = 0x2000, scoped, tag = 'input window, operand 0']
    #allocation3 [shape = 's32[2]{0}', space=sflag, size = 0x8, scoped, tag = 'scoped memory for tpu_custom_call.1']
    #allocation4 [shape = 's32[2]{0}', space=sflag, size = 0x8, scoped, tag = 'scoped memory for tpu_custom_call.1']
    #allocation5 [shape = 'u8[4096]{0}', space=vmem, size = 0x1000, scoped, tag = 'input window, operand 1, single buffered']
    #allocation6 [shape = 's32[1]{0}', space=sflag, size = 0x4, scoped, tag = 'scoped memory for tpu_custom_call.1']
    #allocation7 [shape = 'u8[8192]{0}', space=vmem, size = 0x2000, scoped, tag = 'output window, operand 0']
    %7 = vsyncpa [#allocation3], 0
    %s8 = scalar_lea.sflag [#allocation3], 1
    %9 = vsyncpa %s8, 0
    %10 = vsyncpa [#allocation6], 0
    %11 = vsyncpa [#allocation4], 0
    %s12 = scalar_lea.sflag [#allocation4], 1
    %13 = vsyncpa %s12, 0
    loop: start=0, step=1, limit=4
    $region2: #{tpu_custom_call.1} parent=1 // loop_pre_header
      _
    $region3: #{tpu_custom_call.1} parent=1 // loop_header
      %s15 = sphi 0, %s19
      %p16 = scmp.ge.s32.totalorder %s15, 4
      %s25 = sphi 0, %s27
      %s28 = sphi 0, %s25
      %s29 = sphi 0, %s28
      %s45 = sphi 0, %s29
      %s49 = sphi 0, %s49
      %s51 = sphi 0, %s49
      %s52 = sphi 0, %s51
      %s66 = sphi 0, %s52
      %s72 = sphi 0, %s74
      %s75 = sphi 0, %s72
      %s76 = sphi 0, %s75
      %s92 = sphi 0, %s76
    $region4: #{tpu_custom_call.1} parent=1 // loop_header_branch
      %18 = sbr.rel (%p16) target = $region8
    $region5: #{tpu_custom_call.1} parent=1 // loop_body
      %s20 = ssub.s32 %s15, 1
      %s21 = ssub.s32 %s15, 2
      %s22 = sadd.s32 %s15, 1
      %s23 = ssub.s32 %s15, %s22
      %p24 = scmp.eq.s32.totalorder %s23, 0
      %s26 = sadd.s32 %s25, 1
      %s27 = scalar_select %p24, %s25, %s26
      %p30 = pneg %p24
      %p31 = scmp.eq.s32.totalorder %s15, 1
      %p32 = por %p30, %p31
      %p33 = scmp.ne.s32.totalorder %s25, %s28
      %p34 = scmp.eq.s32.totalorder %s15, 0
      %p35 = por %p33, %p34
      %p36 = scmp.ne.s32.totalorder %s25, %s28
      %p37 = scmp.eq.s32.totalorder %s20, 1
      %p38 = por %p36, %p37
      %p39 = scmp.ne.s32.totalorder %s28, %s29
      %p40 = scmp.eq.s32.totalorder %s20, 0
      %p41 = por %p39, %p40
      %p42 = scmp.ne.s32.totalorder %s28, %s29
      %p43 = scmp.eq.s32.totalorder %s21, 1
      %p44 = por %p42, %p43
      %p46 = scmp.ne.s32.totalorder %s29, %s45
      %p47 = scmp.eq.s32.totalorder %s21, 0
      %p48 = por %p46, %p47
      %s50 = sadd.s32 %s49, 1
      %p53 = scmp.eq.s32.totalorder %s15, 1
      %p54 = scmp.ne.s32.totalorder %s49, %s51
      %p55 = scmp.eq.s32.totalorder %s15, 0
      %p56 = por %p54, %p55
      %p57 = scmp.ne.s32.totalorder %s49, %s51
      %p58 = scmp.eq.s32.totalorder %s20, 1
      %p59 = por %p57, %p58
      %p60 = scmp.ne.s32.totalorder %s51, %s52
      %p61 = scmp.eq.s32.totalorder %s20, 0
      %p62 = por %p60, %p61
      %p63 = scmp.ne.s32.totalorder %s51, %s52
      %p64 = scmp.eq.s32.totalorder %s21, 1
      %p65 = por %p63, %p64
      %p67 = scmp.ne.s32.totalorder %s52, %s66
      %p68 = scmp.eq.s32.totalorder %s21, 0
      %p69 = por %p67, %p68
      %s70 = ssub.s32 %s15, %s22
      %p71 = scmp.eq.s32.totalorder %s70, 0
      %s73 = sadd.s32 %s72, 1
      %s74 = scalar_select %p71, %s72, %s73
      %p77 = pneg %p71
      %p78 = scmp.eq.s32.totalorder %s15, 1
      %p79 = por %p77, %p78
      %p80 = scmp.ne.s32.totalorder %s72, %s75
      %p81 = scmp.eq.s32.totalorder %s15, 0
      %p82 = por %p80, %p81
      %p83 = scmp.ne.s32.totalorder %s72, %s75
      %p84 = scmp.eq.s32.totalorder %s20, 1
      %p85 = por %p83, %p84
      %p86 = scmp.ne.s32.totalorder %s75, %s76
      %p87 = scmp.eq.s32.totalorder %s20, 0
      %p88 = por %p86, %p87
      %p89 = scmp.ne.s32.totalorder %s75, %s76
      %p90 = scmp.eq.s32.totalorder %s21, 1
      %p91 = por %p89, %p90
      %p93 = scmp.ne.s32.totalorder %s76, %s92
      %p94 = scmp.eq.s32.totalorder %s21, 0
      %p95 = por %p93, %p94
      %p96 = scmp.le.s32.totalorder 1, %s15
      %p97 = scmp.lt.s32.totalorder %s15, 3
      %p98 = pnand %p96, %p97
      %p99 = pneg %p98
      // Predicated region
      $region9: #{tpu_custom_call.1} parent=5 // pred_check
        _
      $region10: #{tpu_custom_call.1} parent=5 // pred_check_branch
        %101 = sbr.rel (%p98) target = $region12
      $region11: #{tpu_custom_call.1} parent=5 // pred_region
        %s102 = ssub.s32 %s15, 1
        // Predicated region
        $region13: #{tpu_custom_call.1} parent=11 // pred_check
          %p103 = pneg %p62
        $region14: #{tpu_custom_call.1} parent=11 // pred_check_branch
          %105 = sbr.rel (%p103) target = $region16
        $region15: #{tpu_custom_call.1} parent=11 // pred_region
          %s107 = ssub.s32 128, 128
          %108 = vsyncadd [#allocation6], %s107
          %s110 = sshll.u32 [#allocation5], 4
          %s111 = int_to_ptr.vmem [resolvable:$true] %s110
          %113 = dma.hbm_to_vmem [thread:$0]  %s1, 128, %s111, [#allocation6]
        $region16: #{tpu_custom_call.1} parent=11 // pred_fallthru
          _
      $region12: #{tpu_custom_call.1} parent=5 // pred_fallthru
        _
      %p114 = scmp.lt.s32.totalorder %s15, 2
      // Predicated region
      $region17: #{tpu_custom_call.1} parent=5 // pred_check
        %p115 = pneg %p114
      $region18: #{tpu_custom_call.1} parent=5 // pred_check_branch
        %117 = sbr.rel (%p115) target = $region20
      $region19: #{tpu_custom_call.1} parent=5 // pred_region
        // Predicated region
        $region21: #{tpu_custom_call.1} parent=19 // pred_check
          %p118 = pneg %p35
        $region22: #{tpu_custom_call.1} parent=19 // pred_check_branch
          %120 = sbr.rel (%p118) target = $region24
        $region23: #{tpu_custom_call.1} parent=19 // pred_region
          %s121 = sand.u32 %s25, 1
          %s122 = scalar_lea.sflag [#allocation3], %s121
          %s123 = sand.u32 %s25, 1
          %s124 = smul.addr %s123, 8
          %s125 = scalar_lea.vmem [#allocation2], %s124
          %s127 = ssub.s32 128, 128
          %128 = vsyncadd %s122, %s127
          %s129 = smul.addr %s15, 128
          %s130 = scalar_lea.hbm %s0, %s129
          %s132 = sshll.u32 %s125, 4
          %s133 = int_to_ptr.vmem [resolvable:$true] %s132
          %135 = dma.hbm_to_vmem [thread:$0]  %s130, 128, %s133, %s122
        $region24: #{tpu_custom_call.1} parent=19 // pred_fallthru
          _
      $region20: #{tpu_custom_call.1} parent=5 // pred_fallthru
        _
      %p136 = scmp.le.s32.totalorder 1, %s15
      %p137 = scmp.lt.s32.totalorder %s15, 3
      %p138 = pnand %p136, %p137
      %p139 = pneg %p138
      // Predicated region
      $region25: #{tpu_custom_call.1} parent=5 // pred_check
        _
      $region26: #{tpu_custom_call.1} parent=5 // pred_check_branch
        %141 = sbr.rel (%p138) target = $region28
      $region27: #{tpu_custom_call.1} parent=5 // pred_region
        %s142 = ssub.s32 %s15, 1
        %s143 = sand.u32 %s28, 1
        %s144 = scalar_lea.sflag [#allocation3], %s143
        %s145 = sand.u32 %s28, 1
        %s146 = smul.addr %s145, 8
        %s147 = scalar_lea.vmem [#allocation2], %s146
        // Predicated region
        $region29: #{tpu_custom_call.1} parent=27 // pred_check
          %p148 = pneg %p41
        $region30: #{tpu_custom_call.1} parent=27 // pred_check_branch
          %150 = sbr.rel (%p148) target = $region32
        $region31: #{tpu_custom_call.1} parent=27 // pred_region
          %151 = dma.done %s144, 128
        $region32: #{tpu_custom_call.1} parent=27 // pred_fallthru
          _
        // Predicated region
        $region33: #{tpu_custom_call.1} parent=27 // pred_check
          %p152 = pneg %p62
        $region34: #{tpu_custom_call.1} parent=27 // pred_check_branch
          %154 = sbr.rel (%p152) target = $region36
        $region35: #{tpu_custom_call.1} parent=27 // pred_region
          %155 = dma.done [#allocation6], 128
        $region36: #{tpu_custom_call.1} parent=27 // pred_fallthru
          _
        %s156 = sand.u32 %s28, 1
        %s157 = scalar_lea.sflag [#allocation3], %s156
        %s158 = sand.u32 %s28, 1
        %s159 = smul.addr %s158, 8
        %s160 = scalar_lea.vmem [#allocation2], %s159
        %p161 = pneg %p41
        %p162 = pneg %p38
        %p163 = pneg %p62
        %p164 = pneg %p59
        %p165 = pneg %p88
        %p166 = pneg %p85
        %s167 = sand.u32 %s75, 1
        %s168 = scalar_lea.sflag [#allocation4], %s167
        %s169 = sand.u32 %s75, 1
        %s170 = smul.addr %s169, 8
        %s171 = scalar_lea.vmem [#allocation7], %s170
        %v172 = vld [vmem:[%s147] sm:$0xff]
        %v173 = vld [vmem:[#allocation5] sm:$0xff]
        %v174 = vadd.f32 %v172, %v173
        %175 = vst [vmem:[%s171] sm:$0xff] %v174
        %s176 = sand.u32 %s75, 1
        %s177 = scalar_lea.sflag [#allocation4], %s176
        %s178 = sand.u32 %s75, 1
        %s179 = smul.addr %s178, 8
        %s180 = scalar_lea.vmem [#allocation7], %s179
        // Predicated region
        $region37: #{tpu_custom_call.1} parent=27 // pred_check
          %p181 = pneg %p85
        $region38: #{tpu_custom_call.1} parent=27 // pred_check_branch
          %183 = sbr.rel (%p181) target = $region40
        $region39: #{tpu_custom_call.1} parent=27 // pred_region
          %s185 = ssub.s32 128, 128
          %186 = vsyncadd %s177, %s185
          %s187 = smul.addr %s20, 128
          %s188 = scalar_lea.hbm %s2, %s187
          %s190 = sshll.u32 %s180, 4
          %s191 = int_to_ptr.vmem [resolvable:$true] %s190
          %193 = dma.vmem_to_hbm [thread:$0]  %s191, 128, %s188, %s177
        $region40: #{tpu_custom_call.1} parent=27 // pred_fallthru
          _
      $region28: #{tpu_custom_call.1} parent=5 // pred_fallthru
        _
      %p194 = scmp.le.s32.totalorder 2, %s15
      // Predicated region
      $region41: #{tpu_custom_call.1} parent=5 // pred_check
        %p195 = pneg %p194
      $region42: #{tpu_custom_call.1} parent=5 // pred_check_branch
        %197 = sbr.rel (%p195) target = $region44
      $region43: #{tpu_custom_call.1} parent=5 // pred_region
        %s198 = ssub.s32 %s15, 2
        // Predicated region
        $region45: #{tpu_custom_call.1} parent=43 // pred_check
          %p199 = pneg %p91
        $region46: #{tpu_custom_call.1} parent=43 // pred_check_branch
          %201 = sbr.rel (%p199) target = $region48
        $region47: #{tpu_custom_call.1} parent=43 // pred_region
          %s202 = sand.u32 %s76, 1
          %s203 = scalar_lea.sflag [#allocation4], %s202
          %s204 = sand.u32 %s76, 1
          %s205 = smul.addr %s204, 8
          %s206 = scalar_lea.vmem [#allocation7], %s205
          %207 = dma.done %s203, 128
        $region48: #{tpu_custom_call.1} parent=43 // pred_fallthru
          _
      $region44: #{tpu_custom_call.1} parent=5 // pred_fallthru
        _
    $region6: #{tpu_custom_call.1} parent=1 // loop_footer
      %s19 = sadd.s32 1, %s15
    $region7: #{tpu_custom_call.1} parent=1 // loop_footer_branch
      %14 = sbr.rel target = $region3
    $region8: #{tpu_custom_call.1} parent=1 // loop_exit
      _
    %208 = vsyncpa [#allocation3], 1
    %s209 = scalar_lea.sflag [#allocation3], 1
    %210 = vsyncpa %s209, 1
    %211 = vsyncpa [#allocation6], 1
    %212 = vsyncpa [#allocation4], 1
    %s213 = scalar_lea.sflag [#allocation4], 1
    %214 = vsyncpa %s213, 1

// kernel: tpu_custom_call.1
$region0: #{tpu_custom_call.1}
  #allocation0 [shape = 'u32[]', space=smem, size = 0x4, offset = 0x4, fixed_abs, tag = 'smem constant byte address 0x4 - core index']
  #allocation1 [shape = 'u32[144,128]{1,0:T(1,128)}', space=vmem, size = 0x12000, scoped, tag = 'internal scratch']
  %s0 = inlined_call_operand.vmem [shape: f32[32,16], index: 0, kind: input, shape index: {}]
  %s1 = inlined_call_operand.vmem [shape: f32[16,256], index: 1, kind: input, shape index: {}]
  %s2 = inlined_call_operand.vmem [shape: f32[1,256], index: 2, kind: input, shape index: {}]
  %s3 = inlined_call_operand.hbm [shape: f32[256,256], index: 3, kind: input, shape index: {}]
  %s4 = inlined_call_operand.vmem [shape: f32[1,256], index: 4, kind: input, shape index: {}]
  %s5 = inlined_call_operand.hbm [shape: f32[256,256], index: 5, kind: input, shape index: {}]
  %s6 = inlined_call_operand.vmem [shape: f32[1,256], index: 6, kind: input, shape index: {}]
  %s7 = inlined_call_operand.hbm [shape: f32[256,128], index: 7, kind: input, shape index: {}]
  %s8 = inlined_call_operand.vmem [shape: f32[1,128], index: 8, kind: input, shape index: {}]
  %s9 = inlined_call_operand.hbm [shape: f32[32,128], index: 9, kind: output, shape index: {}]
  %s10 = sld [smem:[#allocation0]]
  $region81: #{tpu_custom_call.1} parent=0
    _
  %s12 = ssub.s32 1, %s10
  %s13 = scalar_select 0, %s12, %s10
  $region1: #{tpu_custom_call.1} parent=0
    #allocation2 [shape = 'u8[262144]{0}', space=vmem, size = 0x40000, scoped, tag = 'input window, operand 3, single buffered']
    #allocation3 [shape = 's32[2]{0}', space=sflag, size = 0x8, scoped, tag = 'scoped memory for tpu_custom_call.1']
    #allocation4 [shape = 's32[2]{0}', space=sflag, size = 0x8, scoped, tag = 'scoped memory for tpu_custom_call.1']
    #allocation5 [shape = 'u8[262144]{0}', space=vmem, size = 0x40000, scoped, tag = 'input window, operand 5, single buffered']
    #allocation6 [shape = 's32[1]{0}', space=sflag, size = 0x4, scoped, tag = 'scoped memory for tpu_custom_call.1']
    #allocation7 [shape = 'u8[131072]{0}', space=vmem, size = 0x20000, scoped, tag = 'input window, operand 7, single buffered']
    #allocation8 [shape = 'u8[16384]{0}', space=vmem, size = 0x4000, scoped, tag = 'output window, operand 0']
    %14 = vsyncpa [#allocation3], 0
    %15 = vsyncpa [#allocation6], 0
    %16 = vsyncpa [#allocation4], 0
    %s17 = scalar_lea.sflag [#allocation4], 1
    %18 = vsyncpa %s17, 0
    loop: start=0, step=1, limit=4
    $region2: #{tpu_custom_call.1} parent=1 // loop_pre_header
      _
    $region3: #{tpu_custom_call.1} parent=1 // loop_header
      %s20 = sphi 0, %s24
      %p21 = scmp.ge.s32.totalorder %s20, 4
      %s30 = sphi 0, %s32
      %s33 = sphi 0, %s30
      %s34 = sphi 0, %s33
      %s50 = sphi 0, %s34
      %s54 = sphi 0, %s54
      %s56 = sphi 0, %s54
      %s57 = sphi 0, %s56
      %s71 = sphi 0, %s57
      %s75 = sphi 0, %s75
      %s77 = sphi 0, %s75
      %s78 = sphi 0, %s77
      %s92 = sphi 0, %s78
      %s96 = sphi 0, %s96
      %s98 = sphi 0, %s96
      %s99 = sphi 0, %s98
      %s113 = sphi 0, %s99
      %s117 = sphi 0, %s117
      %s119 = sphi 0, %s117
      %s120 = sphi 0, %s119
      %s134 = sphi 0, %s120
      %s138 = sphi 0, %s138
      %s140 = sphi 0, %s138
      %s141 = sphi 0, %s140
      %s155 = sphi 0, %s141
      %s159 = sphi 0, %s159
      %s161 = sphi 0, %s159
      %s162 = sphi 0, %s161
      %s176 = sphi 0, %s162
      %s180 = sphi 0, %s180
      %s182 = sphi 0, %s180
      %s183 = sphi 0, %s182
      %s197 = sphi 0, %s183
      %s201 = sphi 0, %s201
      %s203 = sphi 0, %s201
      %s204 = sphi 0, %s203
      %s218 = sphi 0, %s204
      %s224 = sphi 0, %s226
      %s227 = sphi 0, %s224
      %s228 = sphi 0, %s227
      %s244 = sphi 0, %s228
    $region4: #{tpu_custom_call.1} parent=1 // loop_header_branch
      %23 = sbr.rel (%p21) target = $region8
    $region5: #{tpu_custom_call.1} parent=1 // loop_body
      %s25 = ssub.s32 %s20, 1
      %s26 = ssub.s32 %s20, 2
      %s27 = sadd.s32 %s20, 1
      %s28 = ssub.s32 %s20, %s27
      %p29 = scmp.eq.s32.totalorder %s28, 0
      %s31 = sadd.s32 %s30, 1
      %s32 = scalar_select %p29, %s30, %s31
      %p35 = pneg %p29
      %p36 = scmp.eq.s32.totalorder %s20, 1
      %p37 = por %p35, %p36
      %p38 = scmp.ne.s32.totalorder %s30, %s33
      %p39 = scmp.eq.s32.totalorder %s20, 0
      %p40 = por %p38, %p39
      %p41 = scmp.ne.s32.totalorder %s30, %s33
      %p42 = scmp.eq.s32.totalorder %s25, 1
      %p43 = por %p41, %p42
      %p44 = scmp.ne.s32.totalorder %s33, %s34
      %p45 = scmp.eq.s32.totalorder %s25, 0
      %p46 = por %p44, %p45
      %p47 = scmp.ne.s32.totalorder %s33, %s34
      %p48 = scmp.eq.s32.totalorder %s26, 1
      %p49 = por %p47, %p48
      %p51 = scmp.ne.s32.totalorder %s34, %s50
      %p52 = scmp.eq.s32.totalorder %s26, 0
      %p53 = por %p51, %p52
      %s55 = sadd.s32 %s54, 1
      %p58 = scmp.eq.s32.totalorder %s20, 1
      %p59 = scmp.ne.s32.totalorder %s54, %s56
      %p60 = scmp.eq.s32.totalorder %s20, 0
      %p61 = por %p59, %p60
      %p62 = scmp.ne.s32.totalorder %s54, %s56
      %p63 = scmp.eq.s32.totalorder %s25, 1
      %p64 = por %p62, %p63
      %p65 = scmp.ne.s32.totalorder %s56, %s57
      %p66 = scmp.eq.s32.totalorder %s25, 0
      %p67 = por %p65, %p66
      %p68 = scmp.ne.s32.totalorder %s56, %s57
      %p69 = scmp.eq.s32.totalorder %s26, 1
      %p70 = por %p68, %p69
      %p72 = scmp.ne.s32.totalorder %s57, %s71
      %p73 = scmp.eq.s32.totalorder %s26, 0
      %p74 = por %p72, %p73
      %s76 = sadd.s32 %s75, 1
      %p79 = scmp.eq.s32.totalorder %s20, 1
      %p80 = scmp.ne.s32.totalorder %s75, %s77
      %p81 = scmp.eq.s32.totalorder %s20, 0
      %p82 = por %p80, %p81
      %p83 = scmp.ne.s32.totalorder %s75, %s77
      %p84 = scmp.eq.s32.totalorder %s25, 1
      %p85 = por %p83, %p84
      %p86 = scmp.ne.s32.totalorder %s77, %s78
      %p87 = scmp.eq.s32.totalorder %s25, 0
      %p88 = por %p86, %p87
      %p89 = scmp.ne.s32.totalorder %s77, %s78
      %p90 = scmp.eq.s32.totalorder %s26, 1
      %p91 = por %p89, %p90
      %p93 = scmp.ne.s32.totalorder %s78, %s92
      %p94 = scmp.eq.s32.totalorder %s26, 0
      %p95 = por %p93, %p94
      %s97 = sadd.s32 %s96, 1
      %p100 = scmp.eq.s32.totalorder %s20, 1
      %p101 = scmp.ne.s32.totalorder %s96, %s98
      %p102 = scmp.eq.s32.totalorder %s20, 0
      %p103 = por %p101, %p102
      %p104 = scmp.ne.s32.totalorder %s96, %s98
      %p105 = scmp.eq.s32.totalorder %s25, 1
      %p106 = por %p104, %p105
      %p107 = scmp.ne.s32.totalorder %s98, %s99
      %p108 = scmp.eq.s32.totalorder %s25, 0
      %p109 = por %p107, %p108
      %p110 = scmp.ne.s32.totalorder %s98, %s99
      %p111 = scmp.eq.s32.totalorder %s26, 1
      %p112 = por %p110, %p111
      %p114 = scmp.ne.s32.totalorder %s99, %s113
      %p115 = scmp.eq.s32.totalorder %s26, 0
      %p116 = por %p114, %p115
      %s118 = sadd.s32 %s117, 1
      %p121 = scmp.eq.s32.totalorder %s20, 1
      %p122 = scmp.ne.s32.totalorder %s117, %s119
      %p123 = scmp.eq.s32.totalorder %s20, 0
      %p124 = por %p122, %p123
      %p125 = scmp.ne.s32.totalorder %s117, %s119
      %p126 = scmp.eq.s32.totalorder %s25, 1
      %p127 = por %p125, %p126
      %p128 = scmp.ne.s32.totalorder %s119, %s120
      %p129 = scmp.eq.s32.totalorder %s25, 0
      %p130 = por %p128, %p129
      %p131 = scmp.ne.s32.totalorder %s119, %s120
      %p132 = scmp.eq.s32.totalorder %s26, 1
      %p133 = por %p131, %p132
      %p135 = scmp.ne.s32.totalorder %s120, %s134
      %p136 = scmp.eq.s32.totalorder %s26, 0
      %p137 = por %p135, %p136
      %s139 = sadd.s32 %s138, 1
      %p142 = scmp.eq.s32.totalorder %s20, 1
      %p143 = scmp.ne.s32.totalorder %s138, %s140
      %p144 = scmp.eq.s32.totalorder %s20, 0
      %p145 = por %p143, %p144
      %p146 = scmp.ne.s32.totalorder %s138, %s140
      %p147 = scmp.eq.s32.totalorder %s25, 1
      %p148 = por %p146, %p147
      %p149 = scmp.ne.s32.totalorder %s140, %s141
      %p150 = scmp.eq.s32.totalorder %s25, 0
      %p151 = por %p149, %p150
      %p152 = scmp.ne.s32.totalorder %s140, %s141
      %p153 = scmp.eq.s32.totalorder %s26, 1
      %p154 = por %p152, %p153
      %p156 = scmp.ne.s32.totalorder %s141, %s155
      %p157 = scmp.eq.s32.totalorder %s26, 0
      %p158 = por %p156, %p157
      %s160 = sadd.s32 %s159, 1
      %p163 = scmp.eq.s32.totalorder %s20, 1
      %p164 = scmp.ne.s32.totalorder %s159, %s161
      %p165 = scmp.eq.s32.totalorder %s20, 0
      %p166 = por %p164, %p165
      %p167 = scmp.ne.s32.totalorder %s159, %s161
      %p168 = scmp.eq.s32.totalorder %s25, 1
      %p169 = por %p167, %p168
      %p170 = scmp.ne.s32.totalorder %s161, %s162
      %p171 = scmp.eq.s32.totalorder %s25, 0
      %p172 = por %p170, %p171
      %p173 = scmp.ne.s32.totalorder %s161, %s162
      %p174 = scmp.eq.s32.totalorder %s26, 1
      %p175 = por %p173, %p174
      %p177 = scmp.ne.s32.totalorder %s162, %s176
      %p178 = scmp.eq.s32.totalorder %s26, 0
      %p179 = por %p177, %p178
      %s181 = sadd.s32 %s180, 1
      %p184 = scmp.eq.s32.totalorder %s20, 1
      %p185 = scmp.ne.s32.totalorder %s180, %s182
      %p186 = scmp.eq.s32.totalorder %s20, 0
      %p187 = por %p185, %p186
      %p188 = scmp.ne.s32.totalorder %s180, %s182
      %p189 = scmp.eq.s32.totalorder %s25, 1
      %p190 = por %p188, %p189
      %p191 = scmp.ne.s32.totalorder %s182, %s183
      %p192 = scmp.eq.s32.totalorder %s25, 0
      %p193 = por %p191, %p192
      %p194 = scmp.ne.s32.totalorder %s182, %s183
      %p195 = scmp.eq.s32.totalorder %s26, 1
      %p196 = por %p194, %p195
      %p198 = scmp.ne.s32.totalorder %s183, %s197
      %p199 = scmp.eq.s32.totalorder %s26, 0
      %p200 = por %p198, %p199
      %s202 = sadd.s32 %s201, 1
      %p205 = scmp.eq.s32.totalorder %s20, 1
      %p206 = scmp.ne.s32.totalorder %s201, %s203
      %p207 = scmp.eq.s32.totalorder %s20, 0
      %p208 = por %p206, %p207
      %p209 = scmp.ne.s32.totalorder %s201, %s203
      %p210 = scmp.eq.s32.totalorder %s25, 1
      %p211 = por %p209, %p210
      %p212 = scmp.ne.s32.totalorder %s203, %s204
      %p213 = scmp.eq.s32.totalorder %s25, 0
      %p214 = por %p212, %p213
      %p215 = scmp.ne.s32.totalorder %s203, %s204
      %p216 = scmp.eq.s32.totalorder %s26, 1
      %p217 = por %p215, %p216
      %p219 = scmp.ne.s32.totalorder %s204, %s218
      %p220 = scmp.eq.s32.totalorder %s26, 0
      %p221 = por %p219, %p220
      %s222 = ssub.s32 %s20, %s27
      %p223 = scmp.eq.s32.totalorder %s222, 0
      %s225 = sadd.s32 %s224, 1
      %s226 = scalar_select %p223, %s224, %s225
      %p229 = pneg %p223
      %p230 = scmp.eq.s32.totalorder %s20, 1
      %p231 = por %p229, %p230
      %p232 = scmp.ne.s32.totalorder %s224, %s227
      %p233 = scmp.eq.s32.totalorder %s20, 0
      %p234 = por %p232, %p233
      %p235 = scmp.ne.s32.totalorder %s224, %s227
      %p236 = scmp.eq.s32.totalorder %s25, 1
      %p237 = por %p235, %p236
      %p238 = scmp.ne.s32.totalorder %s227, %s228
      %p239 = scmp.eq.s32.totalorder %s25, 0
      %p240 = por %p238, %p239
      %p241 = scmp.ne.s32.totalorder %s227, %s228
      %p242 = scmp.eq.s32.totalorder %s26, 1
      %p243 = por %p241, %p242
      %p245 = scmp.ne.s32.totalorder %s228, %s244
      %p246 = scmp.eq.s32.totalorder %s26, 0
      %p247 = por %p245, %p246
      %p248 = scmp.le.s32.totalorder 1, %s20
      %p249 = scmp.lt.s32.totalorder %s20, 3
      %p250 = pnand %p248, %p249
      %p251 = pneg %p250
      // Predicated region
      $region9: #{tpu_custom_call.1} parent=5 // pred_check
        _
      $region10: #{tpu_custom_call.1} parent=5 // pred_check_branch
        %253 = sbr.rel (%p250) target = $region12
      $region11: #{tpu_custom_call.1} parent=5 // pred_region
        %s254 = ssub.s32 %s20, 1
        // Predicated region
        $region13: #{tpu_custom_call.1} parent=11 // pred_check
          %p255 = pneg %p67
        $region14: #{tpu_custom_call.1} parent=11 // pred_check_branch
          %257 = sbr.rel (%p255) target = $region16
        $region15: #{tpu_custom_call.1} parent=11 // pred_region
          _
        $region16: #{tpu_custom_call.1} parent=11 // pred_fallthru
          _
        // Predicated region
        $region17: #{tpu_custom_call.1} parent=11 // pred_check
          %p258 = pneg %p88
        $region18: #{tpu_custom_call.1} parent=11 // pred_check_branch
          %260 = sbr.rel (%p258) target = $region20
        $region19: #{tpu_custom_call.1} parent=11 // pred_region
          _
        $region20: #{tpu_custom_call.1} parent=11 // pred_fallthru
          _
        // Predicated region
        $region21: #{tpu_custom_call.1} parent=11 // pred_check
          %p261 = pneg %p109
        $region22: #{tpu_custom_call.1} parent=11 // pred_check_branch
          %263 = sbr.rel (%p261) target = $region24
        $region23: #{tpu_custom_call.1} parent=11 // pred_region
          %s265 = ssub.s32 8192, 8192
          %266 = vsyncadd [#allocation3], %s265
          %s267 = sshll.u32 [#allocation2], 4
          %s268 = int_to_ptr.vmem [resolvable:$true] %s267
          %273 = dma.hbm_to_vmem [thread:$0]  %s3, 8192, %s268, [#allocation3], 256, 256, 16
        $region24: #{tpu_custom_call.1} parent=11 // pred_fallthru
          _
        // Predicated region
        $region25: #{tpu_custom_call.1} parent=11 // pred_check
          %p274 = pneg %p130
        $region26: #{tpu_custom_call.1} parent=11 // pred_check_branch
          %276 = sbr.rel (%p274) target = $region28
        $region27: #{tpu_custom_call.1} parent=11 // pred_region
          _
        $region28: #{tpu_custom_call.1} parent=11 // pred_fallthru
          _
        // Predicated region
        $region29: #{tpu_custom_call.1} parent=11 // pred_check
          %p277 = pneg %p151
        $region30: #{tpu_custom_call.1} parent=11 // pred_check_branch
          %279 = sbr.rel (%p277) target = $region32
        $region31: #{tpu_custom_call.1} parent=11 // pred_region
          %s281 = ssub.s32 8192, 8192
          %282 = vsyncadd [#allocation6], %s281
          %s283 = sshll.u32 [#allocation5], 4
          %s284 = int_to_ptr.vmem [resolvable:$true] %s283
          %289 = dma.hbm_to_vmem [thread:$0]  %s5, 8192, %s284, [#allocation6], 256, 256, 16
        $region32: #{tpu_custom_call.1} parent=11 // pred_fallthru
          _
        // Predicated region
        $region33: #{tpu_custom_call.1} parent=11 // pred_check
          %p290 = pneg %p172
        $region34: #{tpu_custom_call.1} parent=11 // pred_check_branch
          %292 = sbr.rel (%p290) target = $region36
        $region35: #{tpu_custom_call.1} parent=11 // pred_region
          _
        $region36: #{tpu_custom_call.1} parent=11 // pred_fallthru
          _
        // Predicated region
        $region37: #{tpu_custom_call.1} parent=11 // pred_check
          %p293 = pneg %p193
        $region38: #{tpu_custom_call.1} parent=11 // pred_check_branch
          %295 = sbr.rel (%p293) target = $region40
        $region39: #{tpu_custom_call.1} parent=11 // pred_region
          %s297 = ssub.s32 4096, 4096
          %298 = vsyncadd [#allocation6], %s297
          %s299 = sshll.u32 [#allocation7], 4
          %s300 = int_to_ptr.vmem [resolvable:$true] %s299
          %305 = dma.hbm_to_vmem [thread:$0]  %s7, 4096, %s300, [#allocation6], 128, 128, 8
        $region40: #{tpu_custom_call.1} parent=11 // pred_fallthru
          _
        // Predicated region
        $region41: #{tpu_custom_call.1} parent=11 // pred_check
          %p306 = pneg %p214
        $region42: #{tpu_custom_call.1} parent=11 // pred_check_branch
          %308 = sbr.rel (%p306) target = $region44
        $region43: #{tpu_custom_call.1} parent=11 // pred_region
          _
        $region44: #{tpu_custom_call.1} parent=11 // pred_fallthru
          _
      $region12: #{tpu_custom_call.1} parent=5 // pred_fallthru
        _
      %p309 = scmp.lt.s32.totalorder %s20, 2
      // Predicated region
      $region45: #{tpu_custom_call.1} parent=5 // pred_check
        %p310 = pneg %p309
      $region46: #{tpu_custom_call.1} parent=5 // pred_check_branch
        %312 = sbr.rel (%p310) target = $region48
      $region47: #{tpu_custom_call.1} parent=5 // pred_region
        // Predicated region
        $region49: #{tpu_custom_call.1} parent=47 // pred_check
          %p313 = pneg %p40
        $region50: #{tpu_custom_call.1} parent=47 // pred_check_branch
          %315 = sbr.rel (%p313) target = $region52
        $region51: #{tpu_custom_call.1} parent=47 // pred_region
          %s316 = smul.u32 2, %s20
          %p317 = scmp.lt.s32.totalorder %s316, 3
          %s318 = scalar_select %p317, %s316, 3
          %s319 = smul.addr %s318, 8
          %s320 = scalar_lea.vmem %s0, %s319
          %s321 = smul.u32 2, %s20
        $region52: #{tpu_custom_call.1} parent=47 // pred_fallthru
          _
      $region48: #{tpu_custom_call.1} parent=5 // pred_fallthru
        _
      %p322 = scmp.le.s32.totalorder 1, %s20
      %p323 = scmp.lt.s32.totalorder %s20, 3
      %p324 = pnand %p322, %p323
      %p325 = pneg %p324
      // Predicated region
      $region53: #{tpu_custom_call.1} parent=5 // pred_check
        _
      $region54: #{tpu_custom_call.1} parent=5 // pred_check_branch
        %327 = sbr.rel (%p324) target = $region56
      $region55: #{tpu_custom_call.1} parent=5 // pred_region
        %s328 = ssub.s32 %s20, 1
        // Predicated region
        $region57: #{tpu_custom_call.1} parent=55 // pred_check
          %p329 = pneg %p109
        $region58: #{tpu_custom_call.1} parent=55 // pred_check_branch
          %331 = sbr.rel (%p329) target = $region60
        $region59: #{tpu_custom_call.1} parent=55 // pred_region
          %332 = dma.done [#allocation3], 8192
        $region60: #{tpu_custom_call.1} parent=55 // pred_fallthru
          _
        // Predicated region
        $region61: #{tpu_custom_call.1} parent=55 // pred_check
          %p333 = pneg %p151
        $region62: #{tpu_custom_call.1} parent=55 // pred_check_branch
          %335 = sbr.rel (%p333) target = $region64
        $region63: #{tpu_custom_call.1} parent=55 // pred_region
          %336 = dma.done [#allocation6], 8192
        $region64: #{tpu_custom_call.1} parent=55 // pred_fallthru
          _
        // Predicated region
        $region65: #{tpu_custom_call.1} parent=55 // pred_check
          %p337 = pneg %p193
        $region66: #{tpu_custom_call.1} parent=55 // pred_check_branch
          %339 = sbr.rel (%p337) target = $region68
        $region67: #{tpu_custom_call.1} parent=55 // pred_region
          %340 = dma.done [#allocation6], 4096
        $region68: #{tpu_custom_call.1} parent=55 // pred_fallthru
          _
        %s341 = smul.u32 2, %s25
        %p342 = scmp.lt.s32.totalorder %s341, 3
        %s343 = scalar_select %p342, %s341, 3
        %s344 = smul.addr %s343, 8
        %s345 = scalar_lea.vmem %s0, %s344
        %p346 = pneg %p46
        %p347 = pneg %p43
        %p348 = pneg %p67
        %p349 = pneg %p64
        %p350 = pneg %p88
        %p351 = pneg %p85
        %p352 = pneg %p109
        %p353 = pneg %p106
        %p354 = pneg %p130
        %p355 = pneg %p127
        %p356 = pneg %p151
        %p357 = pneg %p148
        %p358 = pneg %p172
        %p359 = pneg %p169
        %p360 = pneg %p193
        %p361 = pneg %p190
        %p362 = pneg %p214
        %p363 = pneg %p211
        %p364 = pneg %p240
        %p365 = pneg %p237
        %s366 = sand.u32 %s227, 1
        %s367 = scalar_lea.sflag [#allocation4], %s366
        %s368 = sand.u32 %s227, 1
        %s369 = smul.addr %s368, 16
        %s370 = scalar_lea.vmem [#allocation8], %s369
        %s371 = smul.u32 2, %s25
        %p372 = scmp.lt.s32.totalorder %s371, 3
        %s373 = scalar_select %p372, %s371, 3
        %s374 = smul.addr %s373, 8
        %s375 = scalar_lea.vmem %s0, %s374
        %s376 = smul.u32 2, %s25
        %s377 = smul.u32 2, %s25
        %v378 = vld [vmem:[%s375] sm:$0xff]
        %v379 = vld [vmem:[%s375 + $0x8] sm:$0xff]
        %v380 = vld [vmem:[%s1] sm:$0xff]
        %v381 = vld [vmem:[%s1 + $0x8] sm:$0xff]
        %v382 = vld [vmem:[%s1 + $0x10] sm:$0xff]
        %v383 = vld [vmem:[%s1 + $0x18] sm:$0xff]
        %v384 = vld [vmem:[%s2] sm:$0x3]
        %v386 = vlaneseq
        %v387 = vshrl.u32 %v386, 7
        %v388 = vsub.s32 0, %v387
        %v389 = vrot.slane %v384, %v388
        %v390 = vlaneseq
        %v391 = vshrl.u32 %v390, 7
        %v392 = vsub.s32 1, %v391
        %v393 = vrot.slane %v384, %v392
        %vm396 = vcmask 130048
        %v398 = vsel %vm396, %v378, 0
        %v401 = vsel %vm396, %v379, 0
        %403 = vmatprep.subr.mxu0 %v381
        %404 = vmatpush1.msra.mxu0 %v380
        %405 = vmatprep.subr.mxu0 %v383
        %406 = vmatpush1.msra.mxu0 %v382
        %407 = vmatprep.subr.mxu0 0.0
        %408 = vmatpush1.msra.mxu0 0.0
        %409 = vmatprep.subr.mxu0 0.0
        %410 = vmatpush1.msra.mxu0 0.0
        %411 = vmatprep.subr.mxu0 0.0
        %412 = vmatpush1.msra.mxu0 0.0
        %413 = vmatprep.subr.mxu0 0.0
        %414 = vmatpush1.msra.mxu0 0.0
        %415 = vmatprep.subr.mxu0 0.0
        %416 = vmatpush1.msra.mxu0 0.0
        %417 = vmatprep.subr.mxu0 0.0
        %418 = vmatpush1.msra.mxu0 0.0
        %419 = vmatprep.subr.mxu0 0.0
        %420 = vmatpush1.msra.mxu0 0.0
        %421 = vmatprep.subr.mxu0 0.0
        %422 = vmatpush1.msra.mxu0 0.0
        %423 = vmatprep.subr.mxu0 0.0
        %424 = vmatpush1.msra.mxu0 0.0
        %425 = vmatprep.subr.mxu0 0.0
        %426 = vmatpush1.msra.mxu0 0.0
        %427 = vmatprep.subr.mxu0 0.0
        %428 = vmatpush1.msra.mxu0 0.0
        %429 = vmatprep.subr.mxu0 0.0
        %430 = vmatpush1.msra.mxu0 0.0
        %431 = vmatprep.subr.mxu0 0.0
        %432 = vmatpush1.msra.mxu0 0.0
        %433 = vmatprep.subr.mxu0 0.0
        %434 = vmatpush1.msra.mxu0 0.0
        %435 = vmatprep.subr.mxu0 0.0
        %436 = vmatpush1.msra.mxu0 0.0
        %437 = vmatprep.subr.mxu0 0.0
        %438 = vmatpush1.msra.mxu0 0.0
        %439 = vmatprep.subr.mxu0 0.0
        %440 = vmatpush1.msra.mxu0 0.0
        %441 = vmatprep.subr.mxu0 0.0
        %442 = vmatpush1.msra.mxu0 0.0
        %443 = vmatprep.subr.mxu0 0.0
        %444 = vmatpush1.msra.mxu0 0.0
        %445 = vmatprep.subr.mxu0 0.0
        %446 = vmatpush1.msra.mxu0 0.0
        %447 = vmatprep.subr.mxu0 0.0
        %448 = vmatpush1.msra.mxu0 0.0
        %449 = vmatprep.subr.mxu0 0.0
        %450 = vmatpush1.msra.mxu0 0.0
        %451 = vmatprep.subr.mxu0 0.0
        %452 = vmatpush1.msra.mxu0 0.0
        %453 = vmatprep.subr.mxu0 0.0
        %454 = vmatpush1.msra.mxu0 0.0
        %455 = vmatprep.subr.mxu0 0.0
        %456 = vmatpush1.msra.mxu0 0.0
        %457 = vmatprep.subr.mxu0 0.0
        %458 = vmatpush1.msra.mxu0 0.0
        %459 = vmatprep.subr.mxu0 0.0
        %460 = vmatpush1.msra.mxu0 0.0
        %461 = vmatprep.subr.mxu0 0.0
        %462 = vmatpush1.msra.mxu0 0.0
        %463 = vmatprep.subr.mxu0 0.0
        %464 = vmatpush1.msra.mxu0 0.0
        %465 = vmatprep.subr.mxu0 0.0
        %466 = vmatpush1.msra.mxu0 0.0
        %467 = vmatprep.mubr.f32.mxu0 0.0
        %468 = vmatmul.mubr.f32.gmra.mrb[0].mxu0 %v398
        %v469 = vpop.f32.mrb[0].mxu0
        %v470 = vadd.f32 %v389, %v469
        %v471 = vpop.f32.mrb[0].mxu0
        %v472 = vadd.f32 %v393, %v471
        %473 = vmatprep.mubr.f32.mxu0 0.0
        %474 = vmatmul.mubr.f32.gmra.mrb[0].mxu0 %v401
        %v475 = vpop.f32.mrb[0].mxu0
        %v476 = vadd.f32 %v389, %v475
        %v477 = vpop.f32.mrb[0].mxu0
        %v478 = vadd.f32 %v393, %v477
        %479 = vdwg.mxu0
        %v480 = vmax.f32 %v470, 0.0
        %v481 = vmax.f32 %v472, 0.0
        %v482 = vmax.f32 %v476, 0.0
        %v483 = vmax.f32 %v478, 0.0
        %v484 = vld [vmem:[#allocation2] sm:$0xff]
        %v485 = vld [vmem:[#allocation2 + $0x8] sm:$0xff]
        %v486 = vld [vmem:[#allocation2 + $0x10] sm:$0xff]
        %v487 = vld [vmem:[#allocation2 + $0x18] sm:$0xff]
        %v488 = vld [vmem:[#allocation2 + $0x20] sm:$0xff]
        %v489 = vld [vmem:[#allocation2 + $0x28] sm:$0xff]
        %v490 = vld [vmem:[#allocation2 + $0x30] sm:$0xff]
        %v491 = vld [vmem:[#allocation2 + $0x38] sm:$0xff]
        %v492 = vld [vmem:[#allocation2 + $0x40] sm:$0xff]
        %v493 = vld [vmem:[#allocation2 + $0x48] sm:$0xff]
        %v494 = vld [vmem:[#allocation2 + $0x50] sm:$0xff]
        %v495 = vld [vmem:[#allocation2 + $0x58] sm:$0xff]
        %v496 = vld [vmem:[#allocation2 + $0x60] sm:$0xff]
        %v497 = vld [vmem:[#allocation2 + $0x68] sm:$0xff]
        %v498 = vld [vmem:[#allocation2 + $0x70] sm:$0xff]
        %v499 = vld [vmem:[#allocation2 + $0x78] sm:$0xff]
        %v500 = vld [vmem:[#allocation2 + $0x80] sm:$0xff]
        %v501 = vld [vmem:[#allocation2 + $0x88] sm:$0xff]
        %v502 = vld [vmem:[#allocation2 + $0x90] sm:$0xff]
        %v503 = vld [vmem:[#allocation2 + $0x98] sm:$0xff]
        %v504 = vld [vmem:[#allocation2 + $0xa0] sm:$0xff]
        %v505 = vld [vmem:[#allocation2 + $0xa8] sm:$0xff]
        %v506 = vld [vmem:[#allocation2 + $0xb0] sm:$0xff]
        %v507 = vld [vmem:[#allocation2 + $0xb8] sm:$0xff]
        %v508 = vld [vmem:[#allocation2 + $0xc0] sm:$0xff]
        %v509 = vld [vmem:[#allocation2 + $0xc8] sm:$0xff]
        %v510 = vld [vmem:[#allocation2 + $0xd0] sm:$0xff]
        %v511 = vld [vmem:[#allocation2 + $0xd8] sm:$0xff]
        %v512 = vld [vmem:[#allocation2 + $0xe0] sm:$0xff]
        %v513 = vld [vmem:[#allocation2 + $0xe8] sm:$0xff]
        %v514 = vld [vmem:[#allocation2 + $0xf0] sm:$0xff]
        %v515 = vld [vmem:[#allocation2 + $0xf8] sm:$0xff]
        %v516 = vld [vmem:[#allocation2 + $0x100] sm:$0xff]
        %v517 = vld [vmem:[#allocation2 + $0x108] sm:$0xff]
        %v518 = vld [vmem:[#allocation2 + $0x110] sm:$0xff]
        %v519 = vld [vmem:[#allocation2 + $0x118] sm:$0xff]
        %v520 = vld [vmem:[#allocation2 + $0x120] sm:$0xff]
        %v521 = vld [vmem:[#allocation2 + $0x128] sm:$0xff]
        %v522 = vld [vmem:[#allocation2 + $0x130] sm:$0xff]
        %v523 = vld [vmem:[#allocation2 + $0x138] sm:$0xff]
        %v524 = vld [vmem:[#allocation2 + $0x140] sm:$0xff]
        %v525 = vld [vmem:[#allocation2 + $0x148] sm:$0xff]
        %v526 = vld [vmem:[#allocation2 + $0x150] sm:$0xff]
        %v527 = vld [vmem:[#allocation2 + $0x158] sm:$0xff]
        %v528 = vld [vmem:[#allocation2 + $0x160] sm:$0xff]
        %v529 = vld [vmem:[#allocation2 + $0x168] sm:$0xff]
        %v530 = vld [vmem:[#allocation2 + $0x170] sm:$0xff]
        %v531 = vld [vmem:[#allocation2 + $0x178] sm:$0xff]
        %v532 = vld [vmem:[#allocation2 + $0x180] sm:$0xff]
        %v533 = vld [vmem:[#allocation2 + $0x188] sm:$0xff]
        %v534 = vld [vmem:[#allocation2 + $0x190] sm:$0xff]
        %v535 = vld [vmem:[#allocation2 + $0x198] sm:$0xff]
        %v536 = vld [vmem:[#allocation2 + $0x1a0] sm:$0xff]
        %v537 = vld [vmem:[#allocation2 + $0x1a8] sm:$0xff]
        %v538 = vld [vmem:[#allocation2 + $0x1b0] sm:$0xff]
        %v539 = vld [vmem:[#allocation2 + $0x1b8] sm:$0xff]
        %v540 = vld [vmem:[#allocation2 + $0x1c0] sm:$0xff]
        %v541 = vld [vmem:[#allocation2 + $0x1c8] sm:$0xff]
        %v542 = vld [vmem:[#allocation2 + $0x1d0] sm:$0xff]
        %v543 = vld [vmem:[#allocation2 + $0x1d8] sm:$0xff]
        %v544 = vld [vmem:[#allocation2 + $0x1e0] sm:$0xff]
        %v545 = vld [vmem:[#allocation2 + $0x1e8] sm:$0xff]
        %v546 = vld [vmem:[#allocation2 + $0x1f0] sm:$0xff]
        %v547 = vld [vmem:[#allocation2 + $0x1f8] sm:$0xff]
        %v548 = vld [vmem:[%s4] sm:$0x3]
        %v550 = vlaneseq
        %v551 = vshrl.u32 %v550, 7
        %v552 = vsub.s32 0, %v551
        %v553 = vrot.slane %v548, %v552
        %v554 = vlaneseq
        %v555 = vshrl.u32 %v554, 7
        %v556 = vsub.s32 1, %v555
        %v557 = vrot.slane %v548, %v556
        %560 = vmatprep.subr.mxu0 %v485
        %561 = vmatpush1.msra.mxu0 %v484
        %562 = vmatprep.subr.mxu0 %v487
        %563 = vmatpush1.msra.mxu0 %v486
        %564 = vmatprep.subr.mxu0 %v489
        %565 = vmatpush1.msra.mxu0 %v488
        %566 = vmatprep.subr.mxu0 %v491
        %567 = vmatpush1.msra.mxu0 %v490
        %568 = vmatprep.subr.mxu0 %v493
        %569 = vmatpush1.msra.mxu0 %v492
        %570 = vmatprep.subr.mxu0 %v495
        %571 = vmatpush1.msra.mxu0 %v494
        %572 = vmatprep.subr.mxu0 %v497
        %573 = vmatpush1.msra.mxu0 %v496
        %574 = vmatprep.subr.mxu0 %v499
        %575 = vmatpush1.msra.mxu0 %v498
        %576 = vmatprep.subr.mxu0 %v501
        %577 = vmatpush1.msra.mxu0 %v500
        %578 = vmatprep.subr.mxu0 %v503
        %579 = vmatpush1.msra.mxu0 %v502
        %580 = vmatprep.subr.mxu0 %v505
        %581 = vmatpush1.msra.mxu0 %v504
        %582 = vmatprep.subr.mxu0 %v507
        %583 = vmatpush1.msra.mxu0 %v506
        %584 = vmatprep.subr.mxu0 %v509
        %585 = vmatpush1.msra.mxu0 %v508
        %586 = vmatprep.subr.mxu0 %v511
        %587 = vmatpush1.msra.mxu0 %v510
        %588 = vmatprep.subr.mxu0 %v513
        %589 = vmatpush1.msra.mxu0 %v512
        %590 = vmatprep.subr.mxu0 %v515
        %591 = vmatpush1.msra.mxu0 %v514
        %592 = vmatprep.subr.mxu0 %v517
        %593 = vmatpush1.msra.mxu0 %v516
        %594 = vmatprep.subr.mxu0 %v519
        %595 = vmatpush1.msra.mxu0 %v518
        %596 = vmatprep.subr.mxu0 %v521
        %597 = vmatpush1.msra.mxu0 %v520
        %598 = vmatprep.subr.mxu0 %v523
        %599 = vmatpush1.msra.mxu0 %v522
        %600 = vmatprep.subr.mxu0 %v525
        %601 = vmatpush1.msra.mxu0 %v524
        %602 = vmatprep.subr.mxu0 %v527
        %603 = vmatpush1.msra.mxu0 %v526
        %604 = vmatprep.subr.mxu0 %v529
        %605 = vmatpush1.msra.mxu0 %v528
        %606 = vmatprep.subr.mxu0 %v531
        %607 = vmatpush1.msra.mxu0 %v530
        %608 = vmatprep.subr.mxu0 %v533
        %609 = vmatpush1.msra.mxu0 %v532
        %610 = vmatprep.subr.mxu0 %v535
        %611 = vmatpush1.msra.mxu0 %v534
        %612 = vmatprep.subr.mxu0 %v537
        %613 = vmatpush1.msra.mxu0 %v536
        %614 = vmatprep.subr.mxu0 %v539
        %615 = vmatpush1.msra.mxu0 %v538
        %616 = vmatprep.subr.mxu0 %v541
        %617 = vmatpush1.msra.mxu0 %v540
        %618 = vmatprep.subr.mxu0 %v543
        %619 = vmatpush1.msra.mxu0 %v542
        %620 = vmatprep.subr.mxu0 %v545
        %621 = vmatpush1.msra.mxu0 %v544
        %622 = vmatprep.subr.mxu0 %v547
        %623 = vmatpush1.msra.mxu0 %v546
        %624 = vmatprep.mubr.f32.mxu0 %v481
        %625 = vmatmul.mubr.f32.gmra.mrb[0].mxu0 %v480
        %v626 = vpop.f32.mrb[0].mxu0
        %v627 = vadd.f32 %v553, %v626
        %v628 = vpop.f32.mrb[0].mxu0
        %v629 = vadd.f32 %v557, %v628
        %630 = vmatprep.mubr.f32.mxu0 %v483
        %631 = vmatmul.mubr.f32.gmra.mrb[0].mxu0 %v482
        %v632 = vpop.f32.mrb[0].mxu0
        %v633 = vadd.f32 %v553, %v632
        %v634 = vpop.f32.mrb[0].mxu0
        %v635 = vadd.f32 %v557, %v634
        %636 = vdwg.mxu0
        %v637 = vmax.f32 %v627, 0.0
        %v638 = vmax.f32 %v629, 0.0
        %v639 = vmax.f32 %v633, 0.0
        %v640 = vmax.f32 %v635, 0.0
        %v641 = vld [vmem:[#allocation5] sm:$0xff]
        %v642 = vld [vmem:[#allocation5 + $0x8] sm:$0xff]
        %v643 = vld [vmem:[#allocation5 + $0x10] sm:$0xff]
        %v644 = vld [vmem:[#allocation5 + $0x18] sm:$0xff]
        %v645 = vld [vmem:[#allocation5 + $0x20] sm:$0xff]
        %v646 = vld [vmem:[#allocation5 + $0x28] sm:$0xff]
        %v647 = vld [vmem:[#allocation5 + $0x30] sm:$0xff]
        %v648 = vld [vmem:[#allocation5 + $0x38] sm:$0xff]
        %v649 = vld [vmem:[#allocation5 + $0x40] sm:$0xff]
        %v650 = vld [vmem:[#allocation5 + $0x48] sm:$0xff]
        %v651 = vld [vmem:[#allocation5 + $0x50] sm:$0xff]
        %v652 = vld [vmem:[#allocation5 + $0x58] sm:$0xff]
        %v653 = vld [vmem:[#allocation5 + $0x60] sm:$0xff]
        %v654 = vld [vmem:[#allocation5 + $0x68] sm:$0xff]
        %v655 = vld [vmem:[#allocation5 + $0x70] sm:$0xff]
        %v656 = vld [vmem:[#allocation5 + $0x78] sm:$0xff]
        %v657 = vld [vmem:[#allocation5 + $0x80] sm:$0xff]
        %v658 = vld [vmem:[#allocation5 + $0x88] sm:$0xff]
        %v659 = vld [vmem:[#allocation5 + $0x90] sm:$0xff]
        %v660 = vld [vmem:[#allocation5 + $0x98] sm:$0xff]
        %v661 = vld [vmem:[#allocation5 + $0xa0] sm:$0xff]
        %v662 = vld [vmem:[#allocation5 + $0xa8] sm:$0xff]
        %v663 = vld [vmem:[#allocation5 + $0xb0] sm:$0xff]
        %v664 = vld [vmem:[#allocation5 + $0xb8] sm:$0xff]
        %v665 = vld [vmem:[#allocation5 + $0xc0] sm:$0xff]
        %v666 = vld [vmem:[#allocation5 + $0xc8] sm:$0xff]
        %v667 = vld [vmem:[#allocation5 + $0xd0] sm:$0xff]
        %v668 = vld [vmem:[#allocation5 + $0xd8] sm:$0xff]
        %v669 = vld [vmem:[#allocation5 + $0xe0] sm:$0xff]
        %v670 = vld [vmem:[#allocation5 + $0xe8] sm:$0xff]
        %v671 = vld [vmem:[#allocation5 + $0xf0] sm:$0xff]
        %v672 = vld [vmem:[#allocation5 + $0xf8] sm:$0xff]
        %v673 = vld [vmem:[#allocation5 + $0x100] sm:$0xff]
        %v674 = vld [vmem:[#allocation5 + $0x108] sm:$0xff]
        %v675 = vld [vmem:[#allocation5 + $0x110] sm:$0xff]
        %v676 = vld [vmem:[#allocation5 + $0x118] sm:$0xff]
        %v677 = vld [vmem:[#allocation5 + $0x120] sm:$0xff]
        %v678 = vld [vmem:[#allocation5 + $0x128] sm:$0xff]
        %v679 = vld [vmem:[#allocation5 + $0x130] sm:$0xff]
        %v680 = vld [vmem:[#allocation5 + $0x138] sm:$0xff]
        %v681 = vld [vmem:[#allocation5 + $0x140] sm:$0xff]
        %v682 = vld [vmem:[#allocation5 + $0x148] sm:$0xff]
        %v683 = vld [vmem:[#allocation5 + $0x150] sm:$0xff]
        %v684 = vld [vmem:[#allocation5 + $0x158] sm:$0xff]
        %v685 = vld [vmem:[#allocation5 + $0x160] sm:$0xff]
        %v686 = vld [vmem:[#allocation5 + $0x168] sm:$0xff]
        %v687 = vld [vmem:[#allocation5 + $0x170] sm:$0xff]
        %v688 = vld [vmem:[#allocation5 + $0x178] sm:$0xff]
        %v689 = vld [vmem:[#allocation5 + $0x180] sm:$0xff]
        %v690 = vld [vmem:[#allocation5 + $0x188] sm:$0xff]
        %v691 = vld [vmem:[#allocation5 + $0x190] sm:$0xff]
        %v692 = vld [vmem:[#allocation5 + $0x198] sm:$0xff]
        %v693 = vld [vmem:[#allocation5 + $0x1a0] sm:$0xff]
        %v694 = vld [vmem:[#allocation5 + $0x1a8] sm:$0xff]
        %v695 = vld [vmem:[#allocation5 + $0x1b0] sm:$0xff]
        %v696 = vld [vmem:[#allocation5 + $0x1b8] sm:$0xff]
        %v697 = vld [vmem:[#allocation5 + $0x1c0] sm:$0xff]
        %v698 = vld [vmem:[#allocation5 + $0x1c8] sm:$0xff]
        %v699 = vld [vmem:[#allocation5 + $0x1d0] sm:$0xff]
        %v700 = vld [vmem:[#allocation5 + $0x1d8] sm:$0xff]
        %v701 = vld [vmem:[#allocation5 + $0x1e0] sm:$0xff]
        %v702 = vld [vmem:[#allocation5 + $0x1e8] sm:$0xff]
        %v703 = vld [vmem:[#allocation5 + $0x1f0] sm:$0xff]
        %v704 = vld [vmem:[#allocation5 + $0x1f8] sm:$0xff]
        %v705 = vld [vmem:[%s6] sm:$0x3]
        %v707 = vlaneseq
        %v708 = vshrl.u32 %v707, 7
        %v709 = vsub.s32 0, %v708
        %v710 = vrot.slane %v705, %v709
        %v711 = vlaneseq
        %v712 = vshrl.u32 %v711, 7
        %v713 = vsub.s32 1, %v712
        %v714 = vrot.slane %v705, %v713
        %717 = vmatprep.subr.mxu0 %v642
        %718 = vmatpush1.msra.mxu0 %v641
        %719 = vmatprep.subr.mxu0 %v644
        %720 = vmatpush1.msra.mxu0 %v643
        %721 = vmatprep.subr.mxu0 %v646
        %722 = vmatpush1.msra.mxu0 %v645
        %723 = vmatprep.subr.mxu0 %v648
        %724 = vmatpush1.msra.mxu0 %v647
        %725 = vmatprep.subr.mxu0 %v650
        %726 = vmatpush1.msra.mxu0 %v649
        %727 = vmatprep.subr.mxu0 %v652
        %728 = vmatpush1.msra.mxu0 %v651
        %729 = vmatprep.subr.mxu0 %v654
        %730 = vmatpush1.msra.mxu0 %v653
        %731 = vmatprep.subr.mxu0 %v656
        %732 = vmatpush1.msra.mxu0 %v655
        %733 = vmatprep.subr.mxu0 %v658
        %734 = vmatpush1.msra.mxu0 %v657
        %735 = vmatprep.subr.mxu0 %v660
        %736 = vmatpush1.msra.mxu0 %v659
        %737 = vmatprep.subr.mxu0 %v662
        %738 = vmatpush1.msra.mxu0 %v661
        %739 = vmatprep.subr.mxu0 %v664
        %740 = vmatpush1.msra.mxu0 %v663
        %741 = vmatprep.subr.mxu0 %v666
        %742 = vmatpush1.msra.mxu0 %v665
        %743 = vmatprep.subr.mxu0 %v668
        %744 = vmatpush1.msra.mxu0 %v667
        %745 = vmatprep.subr.mxu0 %v670
        %746 = vmatpush1.msra.mxu0 %v669
        %747 = vmatprep.subr.mxu0 %v672
        %748 = vmatpush1.msra.mxu0 %v671
        %749 = vmatprep.subr.mxu0 %v674
        %750 = vmatpush1.msra.mxu0 %v673
        %751 = vmatprep.subr.mxu0 %v676
        %752 = vmatpush1.msra.mxu0 %v675
        %753 = vmatprep.subr.mxu0 %v678
        %754 = vmatpush1.msra.mxu0 %v677
        %755 = vmatprep.subr.mxu0 %v680
        %756 = vmatpush1.msra.mxu0 %v679
        %757 = vmatprep.subr.mxu0 %v682
        %758 = vmatpush1.msra.mxu0 %v681
        %759 = vmatprep.subr.mxu0 %v684
        %760 = vmatpush1.msra.mxu0 %v683
        %761 = vmatprep.subr.mxu0 %v686
        %762 = vmatpush1.msra.mxu0 %v685
        %763 = vmatprep.subr.mxu0 %v688
        %764 = vmatpush1.msra.mxu0 %v687
        %765 = vmatprep.subr.mxu0 %v690
        %766 = vmatpush1.msra.mxu0 %v689
        %767 = vmatprep.subr.mxu0 %v692
        %768 = vmatpush1.msra.mxu0 %v691
        %769 = vmatprep.subr.mxu0 %v694
        %770 = vmatpush1.msra.mxu0 %v693
        %771 = vmatprep.subr.mxu0 %v696
        %772 = vmatpush1.msra.mxu0 %v695
        %773 = vmatprep.subr.mxu0 %v698
        %774 = vmatpush1.msra.mxu0 %v697
        %775 = vmatprep.subr.mxu0 %v700
        %776 = vmatpush1.msra.mxu0 %v699
        %777 = vmatprep.subr.mxu0 %v702
        %778 = vmatpush1.msra.mxu0 %v701
        %779 = vmatprep.subr.mxu0 %v704
        %780 = vmatpush1.msra.mxu0 %v703
        %781 = vmatprep.mubr.f32.mxu0 %v638
        %782 = vmatmul.mubr.f32.gmra.mrb[0].mxu0 %v637
        %v783 = vpop.f32.mrb[0].mxu0
        %v784 = vadd.f32 %v710, %v783
        %v785 = vpop.f32.mrb[0].mxu0
        %v786 = vadd.f32 %v714, %v785
        %787 = vmatprep.mubr.f32.mxu0 %v640
        %788 = vmatmul.mubr.f32.gmra.mrb[0].mxu0 %v639
        %v789 = vpop.f32.mrb[0].mxu0
        %v790 = vadd.f32 %v710, %v789
        %v791 = vpop.f32.mrb[0].mxu0
        %v792 = vadd.f32 %v714, %v791
        %793 = vdwg.mxu0
        %v794 = vmax.f32 %v784, 0.0
        %v795 = vmax.f32 %v786, 0.0
        %v796 = vmax.f32 %v790, 0.0
        %v797 = vmax.f32 %v792, 0.0
        %v798 = vld [vmem:[#allocation7] sm:$0xff]
        %v799 = vld [vmem:[#allocation7 + $0x8] sm:$0xff]
        %v800 = vld [vmem:[#allocation7 + $0x10] sm:$0xff]
        %v801 = vld [vmem:[#allocation7 + $0x18] sm:$0xff]
        %v802 = vld [vmem:[#allocation7 + $0x20] sm:$0xff]
        %v803 = vld [vmem:[#allocation7 + $0x28] sm:$0xff]
        %v804 = vld [vmem:[#allocation7 + $0x30] sm:$0xff]
        %v805 = vld [vmem:[#allocation7 + $0x38] sm:$0xff]
        %v806 = vld [vmem:[#allocation7 + $0x40] sm:$0xff]
        %v807 = vld [vmem:[#allocation7 + $0x48] sm:$0xff]
        %v808 = vld [vmem:[#allocation7 + $0x50] sm:$0xff]
        %v809 = vld [vmem:[#allocation7 + $0x58] sm:$0xff]
        %v810 = vld [vmem:[#allocation7 + $0x60] sm:$0xff]
        %v811 = vld [vmem:[#allocation7 + $0x68] sm:$0xff]
        %v812 = vld [vmem:[#allocation7 + $0x70] sm:$0xff]
        %v813 = vld [vmem:[#allocation7 + $0x78] sm:$0xff]
        %v814 = vld [vmem:[#allocation7 + $0x80] sm:$0xff]
        %v815 = vld [vmem:[#allocation7 + $0x88] sm:$0xff]
        %v816 = vld [vmem:[#allocation7 + $0x90] sm:$0xff]
        %v817 = vld [vmem:[#allocation7 + $0x98] sm:$0xff]
        %v818 = vld [vmem:[#allocation7 + $0xa0] sm:$0xff]
        %v819 = vld [vmem:[#allocation7 + $0xa8] sm:$0xff]
        %v820 = vld [vmem:[#allocation7 + $0xb0] sm:$0xff]
        %v821 = vld [vmem:[#allocation7 + $0xb8] sm:$0xff]
        %v822 = vld [vmem:[#allocation7 + $0xc0] sm:$0xff]
        %v823 = vld [vmem:[#allocation7 + $0xc8] sm:$0xff]
        %v824 = vld [vmem:[#allocation7 + $0xd0] sm:$0xff]
        %v825 = vld [vmem:[#allocation7 + $0xd8] sm:$0xff]
        %v826 = vld [vmem:[#allocation7 + $0xe0] sm:$0xff]
        %v827 = vld [vmem:[#allocation7 + $0xe8] sm:$0xff]
        %v828 = vld [vmem:[#allocation7 + $0xf0] sm:$0xff]
        %v829 = vld [vmem:[#allocation7 + $0xf8] sm:$0xff]
        %v830 = vld [vmem:[%s8] sm:$0x1]
        %v832 = vlaneseq
        %v833 = vshrl.u32 %v832, 7
        %v834 = vsub.s32 0, %v833
        %v835 = vrot.slane %v830, %v834
        %837 = vmatprep.subr.mxu0 0.0
        %838 = vmatpush1.msra.mxu0 %v798
        %839 = vmatprep.subr.mxu0 0.0
        %840 = vmatpush1.msra.mxu0 %v799
        %841 = vmatprep.subr.mxu0 0.0
        %842 = vmatpush1.msra.mxu0 %v800
        %843 = vmatprep.subr.mxu0 0.0
        %844 = vmatpush1.msra.mxu0 %v801
        %845 = vmatprep.subr.mxu0 0.0
        %846 = vmatpush1.msra.mxu0 %v802
        %847 = vmatprep.subr.mxu0 0.0
        %848 = vmatpush1.msra.mxu0 %v803
        %849 = vmatprep.subr.mxu0 0.0
        %850 = vmatpush1.msra.mxu0 %v804
        %851 = vmatprep.subr.mxu0 0.0
        %852 = vmatpush1.msra.mxu0 %v805
        %853 = vmatprep.subr.mxu0 0.0
        %854 = vmatpush1.msra.mxu0 %v806
        %855 = vmatprep.subr.mxu0 0.0
        %856 = vmatpush1.msra.mxu0 %v807
        %857 = vmatprep.subr.mxu0 0.0
        %858 = vmatpush1.msra.mxu0 %v808
        %859 = vmatprep.subr.mxu0 0.0
        %860 = vmatpush1.msra.mxu0 %v809
        %861 = vmatprep.subr.mxu0 0.0
        %862 = vmatpush1.msra.mxu0 %v810
        %863 = vmatprep.subr.mxu0 0.0
        %864 = vmatpush1.msra.mxu0 %v811
        %865 = vmatprep.subr.mxu0 0.0
        %866 = vmatpush1.msra.mxu0 %v812
        %867 = vmatprep.subr.mxu0 0.0
        %868 = vmatpush1.msra.mxu0 %v813
        %869 = vmatprep.subr.mxu0 0.0
        %870 = vmatpush1.msra.mxu0 %v814
        %871 = vmatprep.subr.mxu0 0.0
        %872 = vmatpush1.msra.mxu0 %v815
        %873 = vmatprep.subr.mxu0 0.0
        %874 = vmatpush1.msra.mxu0 %v816
        %875 = vmatprep.subr.mxu0 0.0
        %876 = vmatpush1.msra.mxu0 %v817
        %877 = vmatprep.subr.mxu0 0.0
        %878 = vmatpush1.msra.mxu0 %v818
        %879 = vmatprep.subr.mxu0 0.0
        %880 = vmatpush1.msra.mxu0 %v819
        %881 = vmatprep.subr.mxu0 0.0
        %882 = vmatpush1.msra.mxu0 %v820
        %883 = vmatprep.subr.mxu0 0.0
        %884 = vmatpush1.msra.mxu0 %v821
        %885 = vmatprep.subr.mxu0 0.0
        %886 = vmatpush1.msra.mxu0 %v822
        %887 = vmatprep.subr.mxu0 0.0
        %888 = vmatpush1.msra.mxu0 %v823
        %889 = vmatprep.subr.mxu0 0.0
        %890 = vmatpush1.msra.mxu0 %v824
        %891 = vmatprep.subr.mxu0 0.0
        %892 = vmatpush1.msra.mxu0 %v825
        %893 = vmatprep.subr.mxu0 0.0
        %894 = vmatpush1.msra.mxu0 %v826
        %895 = vmatprep.subr.mxu0 0.0
        %896 = vmatpush1.msra.mxu0 %v827
        %897 = vmatprep.subr.mxu0 0.0
        %898 = vmatpush1.msra.mxu0 %v828
        %899 = vmatprep.subr.mxu0 0.0
        %900 = vmatpush1.msra.mxu0 %v829
        %901 = vmatprep.mubr.f32.mxu0 %v795
        %902 = vmatmul.mubr.f32.gmra.mrb[0].mxu0 %v794
        %v903 = vpop.f32.mrb[0].mxu0
        %v904 = vadd.f32 %v835, %v903
        %v905 = vpop.f32.mrb[0].mxu0
        %906 = vmatprep.mubr.f32.mxu0 %v797
        %907 = vmatmul.mubr.f32.gmra.mrb[0].mxu0 %v796
        %v908 = vpop.f32.mrb[0].mxu0
        %v909 = vadd.f32 %v835, %v908
        %v910 = vpop.f32.mrb[0].mxu0
        %911 = vdwg.mxu0
        %912 = vst [vmem:[%s370] sm:$0xff] %v904
        %913 = vst [vmem:[%s370 + $0x8] sm:$0xff] %v909
        %s914 = sand.u32 %s227, 1
        %s915 = scalar_lea.sflag [#allocation4], %s914
        %s916 = sand.u32 %s227, 1
        %s917 = smul.addr %s916, 16
        %s918 = scalar_lea.vmem [#allocation8], %s917
        // Predicated region
        $region69: #{tpu_custom_call.1} parent=55 // pred_check
          %p919 = pneg %p237
        $region70: #{tpu_custom_call.1} parent=55 // pred_check_branch
          %921 = sbr.rel (%p919) target = $region72
        $region71: #{tpu_custom_call.1} parent=55 // pred_region
          %s922 = smul.u32 2, %s25
          %s924 = ssub.s32 256, 256
          %925 = vsyncadd %s915, %s924
          %s926 = smul.addr %s922, 128
          %s927 = scalar_lea.hbm %s9, %s926
          %s928 = sshll.u32 %s918, 4
          %s929 = int_to_ptr.vmem [resolvable:$true] %s928
          %934 = dma.vmem_to_hbm [thread:$0]  %s929, 256, %s927, %s915, 128, 128, 8
        $region72: #{tpu_custom_call.1} parent=55 // pred_fallthru
          _
      $region56: #{tpu_custom_call.1} parent=5 // pred_fallthru
        _
      %p935 = scmp.le.s32.totalorder 2, %s20
      // Predicated region
      $region73: #{tpu_custom_call.1} parent=5 // pred_check
        %p936 = pneg %p935
      $region74: #{tpu_custom_call.1} parent=5 // pred_check_branch
        %938 = sbr.rel (%p936) target = $region76
      $region75: #{tpu_custom_call.1} parent=5 // pred_region
        %s939 = ssub.s32 %s20, 2
        // Predicated region
        $region77: #{tpu_custom_call.1} parent=75 // pred_check
          %p940 = pneg %p243
        $region78: #{tpu_custom_call.1} parent=75 // pred_check_branch
          %942 = sbr.rel (%p940) target = $region80
        $region79: #{tpu_custom_call.1} parent=75 // pred_region
          %s943 = sand.u32 %s228, 1
          %s944 = scalar_lea.sflag [#allocation4], %s943
          %s945 = sand.u32 %s228, 1
          %s946 = smul.addr %s945, 16
          %s947 = scalar_lea.vmem [#allocation8], %s946
          %948 = dma.done %s944, 256
        $region80: #{tpu_custom_call.1} parent=75 // pred_fallthru
          _
      $region76: #{tpu_custom_call.1} parent=5 // pred_fallthru
        _
    $region6: #{tpu_custom_call.1} parent=1 // loop_footer
      %s24 = sadd.s32 1, %s20
    $region7: #{tpu_custom_call.1} parent=1 // loop_footer_branch
      %19 = sbr.rel target = $region3
    $region8: #{tpu_custom_call.1} parent=1 // loop_exit
      _
    %949 = vsyncpa [#allocation3], 1
    %s950 = scalar_lea.sflag [#allocation3], 1
    %951 = vsyncpa %s950, 1
    %952 = vsyncpa [#allocation6], 1
    %953 = vsyncpa [#allocation4], 1
    %s954 = scalar_lea.sflag [#allocation4], 1
    %955 = vsyncpa %s954, 1

</llo_original>
